<compile_context>
chip_gen: v6e
topology: v6e:2x2x1
jax: 0.10.0
libtpu: 0.0.40
codegen_flags: <defaults>
</compile_context>

<pallas_src>
import math
from functools import partial

import jax
import jax.numpy as jnp
from jax.experimental import pallas as pl
from jax.experimental.pallas import tpu as pltpu

# ----------------------- small synthetic "BERT" config -----------------------
B, S = 2, 8             # batch, sequence length
H, NH, HD = 32, 2, 16   # hidden size, num heads, head dim
FF = 64                 # FFN intermediate size (logical)
FF_PAD = 128            # lane-dense padded FFN width
N_LAYERS = 2
VOCAB = 100
N_CLASSES = 3
LN_EPS = 1e-12
DROP_P = 0.3
HEAD_PAD = 128          # lane-dense classifier output width
SMALL_W = 128           # lane width of the packed small-parameter array

# packed small-parameter row layout ([N_SMALL_ROWS, SMALL_W] f32)
ROW_EMB_LN_G = 0
ROW_EMB_LN_B = 1
ROW_POOL_B = 2
ROW_OUT_B = 3
ROWS_GLOBAL = 4
ROWS_PER_LAYER = 8      # bqkv, bo, ln1_g, ln1_b, b1, b2, ln2_g, ln2_b
ROW_DROP = ROWS_GLOBAL + N_LAYERS * ROWS_PER_LAYER      # dropout-scale rows (B of them)
N_SMALL_ROWS = ROW_DROP + B

VMEM = pltpu.MemorySpace.VMEM


def _v():
    return pl.BlockSpec(memory_space=VMEM)


# ------------------------------ kernel helpers -------------------------------
def _layernorm(x, g, b):
    mu = jnp.mean(x, axis=-1, keepdims=True)
    var = jnp.mean((x - mu) ** 2, axis=-1, keepdims=True)
    return (x - mu) * jax.lax.rsqrt(var + LN_EPS) * g + b


def _gelu(x):
    return 0.5 * x * (1.0 + jnp.tanh(0.7978845608028654 * (x + 0.044715 * x * x * x)))


def _bf16(x):
    return x.astype(jnp.bfloat16)


# ------------------------------ fused kernel ---------------------------------
def fused_kernel(x_ref, amask_ref, small_ref,
                 wqkv_ref, wo_ref, w1_ref, w2_ref, pw_ref, ow_ref, o_ref):
    # x: [B*S, H] (post-embedding, pre-LN); amask: [B, 1, S] additive bias (hoisted).
    # small: [N_SMALL_ROWS, 128] packed biases / LN scales / dropout scale.
    def srow(r, n):
        return small_ref[r:r + 1, :n]                                 # [1, n]

    x2 = _layernorm(x_ref[...], srow(ROW_EMB_LN_G, H), srow(ROW_EMB_LN_B, H))
    neg_bias = amask_ref[...]                                         # [B, 1, S]
    scale = 1.0 / math.sqrt(HD)

    for li in range(N_LAYERS):                                        # static unroll
        base = ROWS_GLOBAL + li * ROWS_PER_LAYER

        # ---- self-attention: fused QKV matmul, per-head lane slices (no transposes) ----
        qkv = (jnp.dot(_bf16(x2), wqkv_ref[li],
                       preferred_element_type=jnp.float32)
               + srow(base + 0, 3 * NH * HD))                         # [B*S, 3*NH*HD]

        ctx_heads = []
        for h in range(NH):                                           # static unroll
            q_h = qkv[:, (0 * NH + h) * HD:(0 * NH + h + 1) * HD].reshape(B, S, HD)
            k_h = qkv[:, (1 * NH + h) * HD:(1 * NH + h + 1) * HD].reshape(B, S, HD)
            v_h = qkv[:, (2 * NH + h) * HD:(2 * NH + h + 1) * HD].reshape(B, S, HD)

            sc = jnp.einsum('bqd,bkd->bqk', _bf16(q_h), _bf16(k_h),
                            preferred_element_type=jnp.float32) * scale + neg_bias
            sc = sc - jnp.max(sc, axis=-1, keepdims=True)
            p = jnp.exp(sc)
            p = p * pl.reciprocal(jnp.sum(p, axis=-1, keepdims=True), approx=True)

            ctx_h = jnp.einsum('bqk,bkd->bqd', _bf16(p), _bf16(v_h),
                               preferred_element_type=jnp.float32)    # [B, S, HD]
            ctx_heads.append(ctx_h.reshape(B * S, HD))

        ctx = jnp.concatenate(ctx_heads, axis=-1)                     # [B*S, NH*HD]
        attn = (jnp.dot(_bf16(ctx), wo_ref[li],
                        preferred_element_type=jnp.float32)
                + srow(base + 1, H))                                  # [B*S, H]
        x2 = _layernorm(x2 + attn, srow(base + 2, H), srow(base + 3, H))

        # ---- feed-forward (lane-dense FF_PAD intermediate) ----
        hmid = _gelu(jnp.dot(_bf16(x2), w1_ref[li],
                             preferred_element_type=jnp.float32)
                     + srow(base + 4, FF_PAD))                        # [B*S, FF_PAD]
        y = (jnp.dot(_bf16(hmid), w2_ref[li],
                     preferred_element_type=jnp.float32)
             + srow(base + 5, H))
        x2 = _layernorm(x2 + y, srow(base + 6, H), srow(base + 7, H))

    # ---- pooler (CLS token, tanh) -> dropout -> classifier head ----
    cls = x2.reshape(B, S, H)[:, 0, :]                                # [B, H]
    pooled = jnp.tanh(jnp.dot(_bf16(cls), pw_ref[...],
                              preferred_element_type=jnp.float32)
                      + srow(ROW_POOL_B, H))
    dropped = pooled * small_ref[ROW_DROP:ROW_DROP + B, :H]           # dropout mask/scale
    o_ref[...] = (jnp.dot(_bf16(dropped), ow_ref[...],
                          preferred_element_type=jnp.float32)
                  + srow(ROW_OUT_B, HEAD_PAD))                        # [B, HEAD_PAD]


# ------------------------------ parameters -----------------------------------
def init_params(key):
    def nrm(k, shape):
        return 0.02 * jax.random.normal(k, shape, jnp.float32)

    keys = jax.random.split(key, 5 + N_LAYERS)

    # packed small params: all biases zero, LayerNorm gammas one
    small = jnp.zeros((ROW_DROP, SMALL_W), jnp.float32)
    small = small.at[ROW_EMB_LN_G, :H].set(1.0)

    wqkv, wo, w1, w2 = [], [], [], []
    for i in range(N_LAYERS):
        lk = jax.random.split(keys[5 + i], 4)
        base = ROWS_GLOBAL + i * ROWS_PER_LAYER
        wqkv.append(nrm(lk[0], (H, 3 * NH * HD)))                     # fused Q|K|V
        wo.append(nrm(lk[1], (NH * HD, H)))                           # fused output proj
        w1.append(jnp.pad(nrm(lk[2], (H, FF)), ((0, 0), (0, FF_PAD - FF))))
        w2.append(jnp.pad(nrm(lk[3], (FF, H)), ((0, FF_PAD - FF), (0, 0))))
        small = small.at[base + 2, :H].set(1.0)                       # ln1 gamma
        small = small.at[base + 6, :H].set(1.0)                       # ln2 gamma

    out_w = nrm(keys[4], (H, N_CLASSES))                              # nn.Linear(hidden, n_classes)
    params = {
        'word_emb': nrm(keys[0], (VOCAB, H)),
        'pos_emb': nrm(keys[1], (S, H)),
        'tok_emb': nrm(keys[2], (2, H)),
        'pooler_w': nrm(keys[3], (H, H)).astype(jnp.bfloat16),
        # lane-dense classifier head: pad [H, 3] -> [H, 128] with zeros
        'out_w_pad': jnp.pad(out_w, ((0, 0), (0, HEAD_PAD - N_CLASSES))).astype(jnp.bfloat16),
        'small_base': small,                                          # [ROW_DROP, 128] f32
        'wqkv': jnp.stack(wqkv).astype(jnp.bfloat16),
        'wo': jnp.stack(wo).astype(jnp.bfloat16),
        'w1': jnp.stack(w1).astype(jnp.bfloat16),
        'w2': jnp.stack(w2).astype(jnp.bfloat16),
    }
    return params


# -------------------------------- forward ------------------------------------
@partial(jax.jit, static_argnames=('training',))
def sentiment_classifier_forward(params, input_ids, attention_mask, dropout_key,
                                 training=True):
    # BERT embeddings: token gather is glue in plain JAX (fused by XLA under jit).
    emb = (params['word_emb'][input_ids]
           + params['pos_emb'][None, :, :]
           + params['tok_emb'][0][None, None, :])                     # [B, S, H]
    x2 = emb.reshape(B * S, H)

    # additive attention mask (1 -> 0, 0 -> -1e9), hoisted out of the kernel
    amask = (1.0 - attention_mask.astype(jnp.float32)) * -1e9         # [B, S]
    amask_b = amask[:, None, :]                                       # [B, 1, S]

    if training:
        keep = jax.random.bernoulli(dropout_key, 1.0 - DROP_P, (B, H))
        drop_scale = keep.astype(jnp.float32) * (1.0 / (1.0 - DROP_P))
    else:
        drop_scale = jnp.ones((B, H), jnp.float32)                    # eval(): identity
    drop_rows = jnp.zeros((B, SMALL_W), jnp.float32).at[:, :H].set(drop_scale)
    small = jnp.concatenate([params['small_base'], drop_rows], axis=0)  # [N_SMALL_ROWS, 128]

    logits_pad = pl.pallas_call(
        fused_kernel,
        out_shape=jax.ShapeDtypeStruct((B, HEAD_PAD), jnp.float32),
        in_specs=[_v()] * 9,
        out_specs=_v(),
    )(x2, amask_b, small,
      params['wqkv'], params['wo'], params['w1'], params['w2'],
      params['pooler_w'], params['out_w_pad'])

    return logits_pad[:, :N_CLASSES]                                  # [B, n_classes]


if __name__ == "__main__":
    key = jax.random.PRNGKey(0)
    pkey, ikey, dkey = jax.random.split(key, 3)
    params = init_params(pkey)

    input_ids = jax.random.randint(ikey, (B, S), 0, VOCAB, dtype=jnp.int32)
    attention_mask = jnp.ones((B, S), jnp.int32).at[:, S - 2:].set(0)  # last 2 tokens padded

    logits = sentiment_classifier_forward(params, input_ids, attention_mask,
                                          dkey, training=True)
    jax.block_until_ready(logits)
    assert logits.shape == (B, N_CLASSES) and logits.dtype == jnp.float32
    assert bool(jnp.all(jnp.isfinite(logits)))
    print("KERNEL_OK")
</pallas_src>

<mosaic_0001>
module attributes {stable_mosaic.version = 11 : i64} {
  func.func @fused_kernel(%arg0: memref<16x32xf32, #tpu.memory_space<vmem>>, %arg1: memref<2x1x8xf32, #tpu.memory_space<vmem>>, %arg2: memref<22x128xf32, #tpu.memory_space<vmem>>, %arg3: memref<2x32x96xbf16, #tpu.memory_space<vmem>>, %arg4: memref<2x32x32xbf16, #tpu.memory_space<vmem>>, %arg5: memref<2x32x128xbf16, #tpu.memory_space<vmem>>, %arg6: memref<2x128x32xbf16, #tpu.memory_space<vmem>>, %arg7: memref<32x32xbf16, #tpu.memory_space<vmem>>, %arg8: memref<32x128xbf16, #tpu.memory_space<vmem>>, %arg9: memref<2x128xf32, #tpu.memory_space<vmem>>) attributes {dimension_semantics = [], scalar_prefetch = 0 : i64, scratch_operands = 0 : i64, tpu.core_type = #tpu.core_type<tc>} {
    %c0 = arith.constant 0 : index
    %c0_0 = arith.constant 0 : index
    %0 = vector.load %arg0[%c0, %c0_0] : memref<16x32xf32, #tpu.memory_space<vmem>>, vector<16x32xf32>
    %c0_1 = arith.constant 0 : index
    %c0_2 = arith.constant 0 : index
    %1 = vector.load %arg2[%c0_1, %c0_2] : memref<22x128xf32, #tpu.memory_space<vmem>>, vector<1x32xf32>
    %c1 = arith.constant 1 : index
    %c0_3 = arith.constant 0 : index
    %2 = vector.load %arg2[%c1, %c0_3] : memref<22x128xf32, #tpu.memory_space<vmem>>, vector<1x32xf32>
    %cst = arith.constant dense<0.000000e+00> : vector<16xf32>
    %3 = vector.multi_reduction <add>, %0, %cst [1] : vector<16x32xf32> to vector<16xf32>
    %4 = vector.shape_cast %3 : vector<16xf32> to vector<16x1xf32>
    %cst_4 = arith.constant 3.200000e+01 : f32
    %5 = vector.broadcast %cst_4 : f32 to vector<16x1xf32>
    %6 = arith.divf %4, %5 : vector<16x1xf32>
    %7 = vector.broadcast %6 : vector<16x1xf32> to vector<16x32xf32>
    %8 = arith.subf %0, %7 : vector<16x32xf32>
    %9 = arith.mulf %8, %8 : vector<16x32xf32>
    %cst_5 = arith.constant dense<0.000000e+00> : vector<16xf32>
    %10 = vector.multi_reduction <add>, %9, %cst_5 [1] : vector<16x32xf32> to vector<16xf32>
    %11 = vector.shape_cast %10 : vector<16xf32> to vector<16x1xf32>
    %cst_6 = arith.constant 3.200000e+01 : f32
    %12 = vector.broadcast %cst_6 : f32 to vector<16x1xf32>
    %13 = arith.divf %11, %12 : vector<16x1xf32>
    %14 = vector.broadcast %6 : vector<16x1xf32> to vector<16x32xf32>
    %15 = arith.subf %0, %14 : vector<16x32xf32>
    %cst_7 = arith.constant 9.99999996E-13 : f32
    %16 = vector.broadcast %cst_7 : f32 to vector<16x1xf32>
    %17 = arith.addf %13, %16 : vector<16x1xf32>
    %18 = math.rsqrt %17 : vector<16x1xf32>
    %19 = vector.broadcast %18 : vector<16x1xf32> to vector<16x32xf32>
    %20 = arith.mulf %15, %19 : vector<16x32xf32>
    %21 = vector.broadcast %1 : vector<1x32xf32> to vector<16x32xf32>
    %22 = arith.mulf %20, %21 : vector<16x32xf32>
    %23 = vector.broadcast %2 : vector<1x32xf32> to vector<16x32xf32>
    %24 = arith.addf %22, %23 : vector<16x32xf32>
    %c0_8 = arith.constant 0 : index
    %c0_9 = arith.constant 0 : index
    %c0_10 = arith.constant 0 : index
    %25 = vector.load %arg1[%c0_8, %c0_9, %c0_10] : memref<2x1x8xf32, #tpu.memory_space<vmem>>, vector<2x1x8xf32>
    %26 = arith.truncf %24 : vector<16x32xf32> to vector<16x32xbf16>
    %c0_11 = arith.constant 0 : index
    %c0_12 = arith.constant 0 : index
    %c0_13 = arith.constant 0 : index
    %27 = vector.load %arg3[%c0_11, %c0_12, %c0_13] : memref<2x32x96xbf16, #tpu.memory_space<vmem>>, vector<1x32x96xbf16>
    %28 = vector.shape_cast %27 : vector<1x32x96xbf16> to vector<32x96xbf16>
    %cst_14 = arith.constant dense<0.000000e+00> : vector<16x96xf32>
    %29 = tpu.matmul %26, %28, %cst_14 {dimension_numbers = #tpu.dot_dimension_numbers<[1], [0], [0], [1], [0, 0, 1, 1], [], []>} : vector<16x32xbf16>, vector<32x96xbf16>, vector<16x96xf32> -> vector<16x96xf32>
    %c4 = arith.constant 4 : index
    %c0_15 = arith.constant 0 : index
    %30 = vector.load %arg2[%c4, %c0_15] : memref<22x128xf32, #tpu.memory_space<vmem>>, vector<1x96xf32>
    %31 = vector.broadcast %30 : vector<1x96xf32> to vector<16x96xf32>
    %32 = arith.addf %29, %31 : vector<16x96xf32>
    %33 = vector.extract_strided_slice %32 {offsets = [0, 0], sizes = [16, 16], strides = [1, 1]} : vector<16x96xf32> to vector<16x16xf32>
    %34 = vector.shape_cast %33 : vector<16x16xf32> to vector<2x8x16xf32>
    %35 = vector.extract_strided_slice %32 {offsets = [0, 32], sizes = [16, 16], strides = [1, 1]} : vector<16x96xf32> to vector<16x16xf32>
    %36 = vector.shape_cast %35 : vector<16x16xf32> to vector<2x8x16xf32>
    %37 = vector.extract_strided_slice %32 {offsets = [0, 64], sizes = [16, 16], strides = [1, 1]} : vector<16x96xf32> to vector<16x16xf32>
    %38 = vector.shape_cast %37 : vector<16x16xf32> to vector<2x8x16xf32>
    %39 = arith.truncf %34 : vector<2x8x16xf32> to vector<2x8x16xbf16>
    %40 = arith.truncf %36 : vector<2x8x16xf32> to vector<2x8x16xbf16>
    "tpu.trace_start"() <{level = 10 : i32, message = "bqd,bkd->bqk"}> : () -> ()
    %cst_16 = arith.constant dense<0.000000e+00> : vector<2x8x8xf32>
    %41 = tpu.matmul %39, %40, %cst_16 {dimension_numbers = #tpu.dot_dimension_numbers<[2], [2], [1], [1], [0, 0, 0, 1, 1, 1], [0], [0]>} : vector<2x8x16xbf16>, vector<2x8x16xbf16>, vector<2x8x8xf32> -> vector<2x8x8xf32>
    "tpu.trace_stop"() : () -> ()
    %cst_17 = arith.constant 2.500000e-01 : f32
    %42 = vector.broadcast %cst_17 : f32 to vector<2x8x8xf32>
    %43 = arith.mulf %41, %42 : vector<2x8x8xf32>
    %44 = vector.broadcast %25 : vector<2x1x8xf32> to vector<2x8x8xf32>
    %45 = arith.addf %43, %44 : vector<2x8x8xf32>
    %cst_18 = arith.constant dense<0xFF800000> : vector<2x8xf32>
    %46 = vector.multi_reduction <maximumf>, %45, %cst_18 [2] : vector<2x8x8xf32> to vector<2x8xf32>
    %47 = vector.shape_cast %46 : vector<2x8xf32> to vector<2x8x1xf32>
    %48 = vector.broadcast %47 : vector<2x8x1xf32> to vector<2x8x8xf32>
    %49 = arith.subf %45, %48 : vector<2x8x8xf32>
    %50 = math.exp %49 : vector<2x8x8xf32>
    %cst_19 = arith.constant dense<0.000000e+00> : vector<2x8xf32>
    %51 = vector.multi_reduction <add>, %50, %cst_19 [2] : vector<2x8x8xf32> to vector<2x8xf32>
    %52 = vector.shape_cast %51 : vector<2x8xf32> to vector<2x8x1xf32>
    %53 = tpu.reciprocal %52 {approx = true} : vector<2x8x1xf32> -> vector<2x8x1xf32>
    %54 = vector.broadcast %53 : vector<2x8x1xf32> to vector<2x8x8xf32>
    %55 = arith.mulf %50, %54 : vector<2x8x8xf32>
    %56 = arith.truncf %55 : vector<2x8x8xf32> to vector<2x8x8xbf16>
    %57 = arith.truncf %38 : vector<2x8x16xf32> to vector<2x8x16xbf16>
    "tpu.trace_start"() <{level = 10 : i32, message = "bqk,bkd->bqd"}> : () -> ()
    %cst_20 = arith.constant dense<0.000000e+00> : vector<2x8x16xf32>
    %58 = tpu.matmul %56, %57, %cst_20 {dimension_numbers = #tpu.dot_dimension_numbers<[2], [1], [1], [2], [0, 0, 0, 1, 1, 2], [0], [0]>} : vector<2x8x8xbf16>, vector<2x8x16xbf16>, vector<2x8x16xf32> -> vector<2x8x16xf32>
    "tpu.trace_stop"() : () -> ()
    %59 = vector.shape_cast %58 : vector<2x8x16xf32> to vector<16x16xf32>
    %60 = vector.extract_strided_slice %32 {offsets = [0, 16], sizes = [16, 16], strides = [1, 1]} : vector<16x96xf32> to vector<16x16xf32>
    %61 = vector.shape_cast %60 : vector<16x16xf32> to vector<2x8x16xf32>
    %62 = vector.extract_strided_slice %32 {offsets = [0, 48], sizes = [16, 16], strides = [1, 1]} : vector<16x96xf32> to vector<16x16xf32>
    %63 = vector.shape_cast %62 : vector<16x16xf32> to vector<2x8x16xf32>
    %64 = vector.extract_strided_slice %32 {offsets = [0, 80], sizes = [16, 16], strides = [1, 1]} : vector<16x96xf32> to vector<16x16xf32>
    %65 = vector.shape_cast %64 : vector<16x16xf32> to vector<2x8x16xf32>
    %66 = arith.truncf %61 : vector<2x8x16xf32> to vector<2x8x16xbf16>
    %67 = arith.truncf %63 : vector<2x8x16xf32> to vector<2x8x16xbf16>
    "tpu.trace_start"() <{level = 10 : i32, message = "bqd,bkd->bqk"}> : () -> ()
    %cst_21 = arith.constant dense<0.000000e+00> : vector<2x8x8xf32>
    %68 = tpu.matmul %66, %67, %cst_21 {dimension_numbers = #tpu.dot_dimension_numbers<[2], [2], [1], [1], [0, 0, 0, 1, 1, 1], [0], [0]>} : vector<2x8x16xbf16>, vector<2x8x16xbf16>, vector<2x8x8xf32> -> vector<2x8x8xf32>
    "tpu.trace_stop"() : () -> ()
    %cst_22 = arith.constant 2.500000e-01 : f32
    %69 = vector.broadcast %cst_22 : f32 to vector<2x8x8xf32>
    %70 = arith.mulf %68, %69 : vector<2x8x8xf32>
    %71 = vector.broadcast %25 : vector<2x1x8xf32> to vector<2x8x8xf32>
    %72 = arith.addf %70, %71 : vector<2x8x8xf32>
    %cst_23 = arith.constant dense<0xFF800000> : vector<2x8xf32>
    %73 = vector.multi_reduction <maximumf>, %72, %cst_23 [2] : vector<2x8x8xf32> to vector<2x8xf32>
    %74 = vector.shape_cast %73 : vector<2x8xf32> to vector<2x8x1xf32>
    %75 = vector.broadcast %74 : vector<2x8x1xf32> to vector<2x8x8xf32>
    %76 = arith.subf %72, %75 : vector<2x8x8xf32>
    %77 = math.exp %76 : vector<2x8x8xf32>
    %cst_24 = arith.constant dense<0.000000e+00> : vector<2x8xf32>
    %78 = vector.multi_reduction <add>, %77, %cst_24 [2] : vector<2x8x8xf32> to vector<2x8xf32>
    %79 = vector.shape_cast %78 : vector<2x8xf32> to vector<2x8x1xf32>
    %80 = tpu.reciprocal %79 {approx = true} : vector<2x8x1xf32> -> vector<2x8x1xf32>
    %81 = vector.broadcast %80 : vector<2x8x1xf32> to vector<2x8x8xf32>
    %82 = arith.mulf %77, %81 : vector<2x8x8xf32>
    %83 = arith.truncf %82 : vector<2x8x8xf32> to vector<2x8x8xbf16>
    %84 = arith.truncf %65 : vector<2x8x16xf32> to vector<2x8x16xbf16>
    "tpu.trace_start"() <{level = 10 : i32, message = "bqk,bkd->bqd"}> : () -> ()
    %cst_25 = arith.constant dense<0.000000e+00> : vector<2x8x16xf32>
    %85 = tpu.matmul %83, %84, %cst_25 {dimension_numbers = #tpu.dot_dimension_numbers<[2], [1], [1], [2], [0, 0, 0, 1, 1, 2], [0], [0]>} : vector<2x8x8xbf16>, vector<2x8x16xbf16>, vector<2x8x16xf32> -> vector<2x8x16xf32>
    "tpu.trace_stop"() : () -> ()
    %86 = vector.shape_cast %85 : vector<2x8x16xf32> to vector<16x16xf32>
    %87 = tpu.concatenate %59, %86 in 1 : vector<16x16xf32>, vector<16x16xf32> -> vector<16x32xf32>
    %88 = arith.truncf %87 : vector<16x32xf32> to vector<16x32xbf16>
    %c0_26 = arith.constant 0 : index
    %c0_27 = arith.constant 0 : index
    %c0_28 = arith.constant 0 : index
    %89 = vector.load %arg4[%c0_26, %c0_27, %c0_28] : memref<2x32x32xbf16, #tpu.memory_space<vmem>>, vector<1x32x32xbf16>
    %90 = vector.shape_cast %89 : vector<1x32x32xbf16> to vector<32x32xbf16>
    %cst_29 = arith.constant dense<0.000000e+00> : vector<16x32xf32>
    %91 = tpu.matmul %88, %90, %cst_29 {dimension_numbers = #tpu.dot_dimension_numbers<[1], [0], [0], [1], [0, 0, 1, 1], [], []>} : vector<16x32xbf16>, vector<32x32xbf16>, vector<16x32xf32> -> vector<16x32xf32>
    %c5 = arith.constant 5 : index
    %c0_30 = arith.constant 0 : index
    %92 = vector.load %arg2[%c5, %c0_30] : memref<22x128xf32, #tpu.memory_space<vmem>>, vector<1x32xf32>
    %93 = vector.broadcast %92 : vector<1x32xf32> to vector<16x32xf32>
    %94 = arith.addf %91, %93 : vector<16x32xf32>
    %95 = arith.addf %24, %94 : vector<16x32xf32>
    %c6 = arith.constant 6 : index
    %c0_31 = arith.constant 0 : index
    %96 = vector.load %arg2[%c6, %c0_31] : memref<22x128xf32, #tpu.memory_space<vmem>>, vector<1x32xf32>
    %c7 = arith.constant 7 : index
    %c0_32 = arith.constant 0 : index
    %97 = vector.load %arg2[%c7, %c0_32] : memref<22x128xf32, #tpu.memory_space<vmem>>, vector<1x32xf32>
    %cst_33 = arith.constant dense<0.000000e+00> : vector<16xf32>
    %98 = vector.multi_reduction <add>, %95, %cst_33 [1] : vector<16x32xf32> to vector<16xf32>
    %99 = vector.shape_cast %98 : vector<16xf32> to vector<16x1xf32>
    %cst_34 = arith.constant 3.200000e+01 : f32
    %100 = vector.broadcast %cst_34 : f32 to vector<16x1xf32>
    %101 = arith.divf %99, %100 : vector<16x1xf32>
    %102 = vector.broadcast %101 : vector<16x1xf32> to vector<16x32xf32>
    %103 = arith.subf %95, %102 : vector<16x32xf32>
    %104 = arith.mulf %103, %103 : vector<16x32xf32>
    %cst_35 = arith.constant dense<0.000000e+00> : vector<16xf32>
    %105 = vector.multi_reduction <add>, %104, %cst_35 [1] : vector<16x32xf32> to vector<16xf32>
    %106 = vector.shape_cast %105 : vector<16xf32> to vector<16x1xf32>
    %cst_36 = arith.constant 3.200000e+01 : f32
    %107 = vector.broadcast %cst_36 : f32 to vector<16x1xf32>
    %108 = arith.divf %106, %107 : vector<16x1xf32>
    %109 = vector.broadcast %101 : vector<16x1xf32> to vector<16x32xf32>
    %110 = arith.subf %95, %109 : vector<16x32xf32>
    %cst_37 = arith.constant 9.99999996E-13 : f32
    %111 = vector.broadcast %cst_37 : f32 to vector<16x1xf32>
    %112 = arith.addf %108, %111 : vector<16x1xf32>
    %113 = math.rsqrt %112 : vector<16x1xf32>
    %114 = vector.broadcast %113 : vector<16x1xf32> to vector<16x32xf32>
    %115 = arith.mulf %110, %114 : vector<16x32xf32>
    %116 = vector.broadcast %96 : vector<1x32xf32> to vector<16x32xf32>
    %117 = arith.mulf %115, %116 : vector<16x32xf32>
    %118 = vector.broadcast %97 : vector<1x32xf32> to vector<16x32xf32>
    %119 = arith.addf %117, %118 : vector<16x32xf32>
    %120 = arith.truncf %119 : vector<16x32xf32> to vector<16x32xbf16>
    %c0_38 = arith.constant 0 : index
    %c0_39 = arith.constant 0 : index
    %c0_40 = arith.constant 0 : index
    %121 = vector.load %arg5[%c0_38, %c0_39, %c0_40] : memref<2x32x128xbf16, #tpu.memory_space<vmem>>, vector<1x32x128xbf16>
    %122 = vector.shape_cast %121 : vector<1x32x128xbf16> to vector<32x128xbf16>
    %cst_41 = arith.constant dense<0.000000e+00> : vector<16x128xf32>
    %123 = tpu.matmul %120, %122, %cst_41 {dimension_numbers = #tpu.dot_dimension_numbers<[1], [0], [0], [1], [0, 0, 1, 1], [], []>} : vector<16x32xbf16>, vector<32x128xbf16>, vector<16x128xf32> -> vector<16x128xf32>
    %c8 = arith.constant 8 : index
    %c0_42 = arith.constant 0 : index
    %124 = vector.load %arg2[%c8, %c0_42] : memref<22x128xf32, #tpu.memory_space<vmem>>, vector<1x128xf32>
    %125 = vector.broadcast %124 : vector<1x128xf32> to vector<16x128xf32>
    %126 = arith.addf %123, %125 : vector<16x128xf32>
    %cst_43 = arith.constant 5.000000e-01 : f32
    %127 = vector.broadcast %cst_43 : f32 to vector<16x128xf32>
    %128 = arith.mulf %127, %126 : vector<16x128xf32>
    %cst_44 = arith.constant 4.471500e-02 : f32
    %129 = vector.broadcast %cst_44 : f32 to vector<16x128xf32>
    %130 = arith.mulf %129, %126 : vector<16x128xf32>
    %131 = arith.mulf %130, %126 : vector<16x128xf32>
    %132 = arith.mulf %131, %126 : vector<16x128xf32>
    %133 = arith.addf %126, %132 : vector<16x128xf32>
    %cst_45 = arith.constant 0.797884583 : f32
    %134 = vector.broadcast %cst_45 : f32 to vector<16x128xf32>
    %135 = arith.mulf %134, %133 : vector<16x128xf32>
    %136 = math.tanh %135 : vector<16x128xf32>
    %cst_46 = arith.constant 1.000000e+00 : f32
    %137 = vector.broadcast %cst_46 : f32 to vector<16x128xf32>
    %138 = arith.addf %137, %136 : vector<16x128xf32>
    %139 = arith.mulf %128, %138 : vector<16x128xf32>
    %140 = arith.truncf %139 : vector<16x128xf32> to vector<16x128xbf16>
    %c0_47 = arith.constant 0 : index
    %c0_48 = arith.constant 0 : index
    %c0_49 = arith.constant 0 : index
    %141 = vector.load %arg6[%c0_47, %c0_48, %c0_49] : memref<2x128x32xbf16, #tpu.memory_space<vmem>>, vector<1x128x32xbf16>
    %142 = vector.shape_cast %141 : vector<1x128x32xbf16> to vector<128x32xbf16>
    %cst_50 = arith.constant dense<0.000000e+00> : vector<16x32xf32>
    %143 = tpu.matmul %140, %142, %cst_50 {dimension_numbers = #tpu.dot_dimension_numbers<[1], [0], [0], [1], [0, 0, 1, 1], [], []>} : vector<16x128xbf16>, vector<128x32xbf16>, vector<16x32xf32> -> vector<16x32xf32>
    %c9 = arith.constant 9 : index
    %c0_51 = arith.constant 0 : index
    %144 = vector.load %arg2[%c9, %c0_51] : memref<22x128xf32, #tpu.memory_space<vmem>>, vector<1x32xf32>
    %145 = vector.broadcast %144 : vector<1x32xf32> to vector<16x32xf32>
    %146 = arith.addf %143, %145 : vector<16x32xf32>
    %147 = arith.addf %119, %146 : vector<16x32xf32>
    %c10 = arith.constant 10 : index
    %c0_52 = arith.constant 0 : index
    %148 = vector.load %arg2[%c10, %c0_52] : memref<22x128xf32, #tpu.memory_space<vmem>>, vector<1x32xf32>
    %c11 = arith.constant 11 : index
    %c0_53 = arith.constant 0 : index
    %149 = vector.load %arg2[%c11, %c0_53] : memref<22x128xf32, #tpu.memory_space<vmem>>, vector<1x32xf32>
    %cst_54 = arith.constant dense<0.000000e+00> : vector<16xf32>
    %150 = vector.multi_reduction <add>, %147, %cst_54 [1] : vector<16x32xf32> to vector<16xf32>
    %151 = vector.shape_cast %150 : vector<16xf32> to vector<16x1xf32>
    %cst_55 = arith.constant 3.200000e+01 : f32
    %152 = vector.broadcast %cst_55 : f32 to vector<16x1xf32>
    %153 = arith.divf %151, %152 : vector<16x1xf32>
    %154 = vector.broadcast %153 : vector<16x1xf32> to vector<16x32xf32>
    %155 = arith.subf %147, %154 : vector<16x32xf32>
    %156 = arith.mulf %155, %155 : vector<16x32xf32>
    %cst_56 = arith.constant dense<0.000000e+00> : vector<16xf32>
    %157 = vector.multi_reduction <add>, %156, %cst_56 [1] : vector<16x32xf32> to vector<16xf32>
    %158 = vector.shape_cast %157 : vector<16xf32> to vector<16x1xf32>
    %cst_57 = arith.constant 3.200000e+01 : f32
    %159 = vector.broadcast %cst_57 : f32 to vector<16x1xf32>
    %160 = arith.divf %158, %159 : vector<16x1xf32>
    %161 = vector.broadcast %153 : vector<16x1xf32> to vector<16x32xf32>
    %162 = arith.subf %147, %161 : vector<16x32xf32>
    %cst_58 = arith.constant 9.99999996E-13 : f32
    %163 = vector.broadcast %cst_58 : f32 to vector<16x1xf32>
    %164 = arith.addf %160, %163 : vector<16x1xf32>
    %165 = math.rsqrt %164 : vector<16x1xf32>
    %166 = vector.broadcast %165 : vector<16x1xf32> to vector<16x32xf32>
    %167 = arith.mulf %162, %166 : vector<16x32xf32>
    %168 = vector.broadcast %148 : vector<1x32xf32> to vector<16x32xf32>
    %169 = arith.mulf %167, %168 : vector<16x32xf32>
    %170 = vector.broadcast %149 : vector<1x32xf32> to vector<16x32xf32>
    %171 = arith.addf %169, %170 : vector<16x32xf32>
    %172 = arith.truncf %171 : vector<16x32xf32> to vector<16x32xbf16>
    %c1_59 = arith.constant 1 : index
    %c0_60 = arith.constant 0 : index
    %c0_61 = arith.constant 0 : index
    %173 = vector.load %arg3[%c1_59, %c0_60, %c0_61] : memref<2x32x96xbf16, #tpu.memory_space<vmem>>, vector<1x32x96xbf16>
    %174 = vector.shape_cast %173 : vector<1x32x96xbf16> to vector<32x96xbf16>
    %cst_62 = arith.constant dense<0.000000e+00> : vector<16x96xf32>
    %175 = tpu.matmul %172, %174, %cst_62 {dimension_numbers = #tpu.dot_dimension_numbers<[1], [0], [0], [1], [0, 0, 1, 1], [], []>} : vector<16x32xbf16>, vector<32x96xbf16>, vector<16x96xf32> -> vector<16x96xf32>
    %c12 = arith.constant 12 : index
    %c0_63 = arith.constant 0 : index
    %176 = vector.load %arg2[%c12, %c0_63] : memref<22x128xf32, #tpu.memory_space<vmem>>, vector<1x96xf32>
    %177 = vector.broadcast %176 : vector<1x96xf32> to vector<16x96xf32>
    %178 = arith.addf %175, %177 : vector<16x96xf32>
    %179 = vector.extract_strided_slice %178 {offsets = [0, 0], sizes = [16, 16], strides = [1, 1]} : vector<16x96xf32> to vector<16x16xf32>
    %180 = vector.shape_cast %179 : vector<16x16xf32> to vector<2x8x16xf32>
    %181 = vector.extract_strided_slice %178 {offsets = [0, 32], sizes = [16, 16], strides = [1, 1]} : vector<16x96xf32> to vector<16x16xf32>
    %182 = vector.shape_cast %181 : vector<16x16xf32> to vector<2x8x16xf32>
    %183 = vector.extract_strided_slice %178 {offsets = [0, 64], sizes = [16, 16], strides = [1, 1]} : vector<16x96xf32> to vector<16x16xf32>
    %184 = vector.shape_cast %183 : vector<16x16xf32> to vector<2x8x16xf32>
    %185 = arith.truncf %180 : vector<2x8x16xf32> to vector<2x8x16xbf16>
    %186 = arith.truncf %182 : vector<2x8x16xf32> to vector<2x8x16xbf16>
    "tpu.trace_start"() <{level = 10 : i32, message = "bqd,bkd->bqk"}> : () -> ()
    %cst_64 = arith.constant dense<0.000000e+00> : vector<2x8x8xf32>
    %187 = tpu.matmul %185, %186, %cst_64 {dimension_numbers = #tpu.dot_dimension_numbers<[2], [2], [1], [1], [0, 0, 0, 1, 1, 1], [0], [0]>} : vector<2x8x16xbf16>, vector<2x8x16xbf16>, vector<2x8x8xf32> -> vector<2x8x8xf32>
    "tpu.trace_stop"() : () -> ()
    %cst_65 = arith.constant 2.500000e-01 : f32
    %188 = vector.broadcast %cst_65 : f32 to vector<2x8x8xf32>
    %189 = arith.mulf %187, %188 : vector<2x8x8xf32>
    %190 = vector.broadcast %25 : vector<2x1x8xf32> to vector<2x8x8xf32>
    %191 = arith.addf %189, %190 : vector<2x8x8xf32>
    %cst_66 = arith.constant dense<0xFF800000> : vector<2x8xf32>
    %192 = vector.multi_reduction <maximumf>, %191, %cst_66 [2] : vector<2x8x8xf32> to vector<2x8xf32>
    %193 = vector.shape_cast %192 : vector<2x8xf32> to vector<2x8x1xf32>
    %194 = vector.broadcast %193 : vector<2x8x1xf32> to vector<2x8x8xf32>
    %195 = arith.subf %191, %194 : vector<2x8x8xf32>
    %196 = math.exp %195 : vector<2x8x8xf32>
    %cst_67 = arith.constant dense<0.000000e+00> : vector<2x8xf32>
    %197 = vector.multi_reduction <add>, %196, %cst_67 [2] : vector<2x8x8xf32> to vector<2x8xf32>
    %198 = vector.shape_cast %197 : vector<2x8xf32> to vector<2x8x1xf32>
    %199 = tpu.reciprocal %198 {approx = true} : vector<2x8x1xf32> -> vector<2x8x1xf32>
    %200 = vector.broadcast %199 : vector<2x8x1xf32> to vector<2x8x8xf32>
    %201 = arith.mulf %196, %200 : vector<2x8x8xf32>
    %202 = arith.truncf %201 : vector<2x8x8xf32> to vector<2x8x8xbf16>
    %203 = arith.truncf %184 : vector<2x8x16xf32> to vector<2x8x16xbf16>
    "tpu.trace_start"() <{level = 10 : i32, message = "bqk,bkd->bqd"}> : () -> ()
    %cst_68 = arith.constant dense<0.000000e+00> : vector<2x8x16xf32>
    %204 = tpu.matmul %202, %203, %cst_68 {dimension_numbers = #tpu.dot_dimension_numbers<[2], [1], [1], [2], [0, 0, 0, 1, 1, 2], [0], [0]>} : vector<2x8x8xbf16>, vector<2x8x16xbf16>, vector<2x8x16xf32> -> vector<2x8x16xf32>
    "tpu.trace_stop"() : () -> ()
    %205 = vector.shape_cast %204 : vector<2x8x16xf32> to vector<16x16xf32>
    %206 = vector.extract_strided_slice %178 {offsets = [0, 16], sizes = [16, 16], strides = [1, 1]} : vector<16x96xf32> to vector<16x16xf32>
    %207 = vector.shape_cast %206 : vector<16x16xf32> to vector<2x8x16xf32>
    %208 = vector.extract_strided_slice %178 {offsets = [0, 48], sizes = [16, 16], strides = [1, 1]} : vector<16x96xf32> to vector<16x16xf32>
    %209 = vector.shape_cast %208 : vector<16x16xf32> to vector<2x8x16xf32>
    %210 = vector.extract_strided_slice %178 {offsets = [0, 80], sizes = [16, 16], strides = [1, 1]} : vector<16x96xf32> to vector<16x16xf32>
    %211 = vector.shape_cast %210 : vector<16x16xf32> to vector<2x8x16xf32>
    %212 = arith.truncf %207 : vector<2x8x16xf32> to vector<2x8x16xbf16>
    %213 = arith.truncf %209 : vector<2x8x16xf32> to vector<2x8x16xbf16>
    "tpu.trace_start"() <{level = 10 : i32, message = "bqd,bkd->bqk"}> : () -> ()
    %cst_69 = arith.constant dense<0.000000e+00> : vector<2x8x8xf32>
    %214 = tpu.matmul %212, %213, %cst_69 {dimension_numbers = #tpu.dot_dimension_numbers<[2], [2], [1], [1], [0, 0, 0, 1, 1, 1], [0], [0]>} : vector<2x8x16xbf16>, vector<2x8x16xbf16>, vector<2x8x8xf32> -> vector<2x8x8xf32>
    "tpu.trace_stop"() : () -> ()
    %cst_70 = arith.constant 2.500000e-01 : f32
    %215 = vector.broadcast %cst_70 : f32 to vector<2x8x8xf32>
    %216 = arith.mulf %214, %215 : vector<2x8x8xf32>
    %217 = vector.broadcast %25 : vector<2x1x8xf32> to vector<2x8x8xf32>
    %218 = arith.addf %216, %217 : vector<2x8x8xf32>
    %cst_71 = arith.constant dense<0xFF800000> : vector<2x8xf32>
    %219 = vector.multi_reduction <maximumf>, %218, %cst_71 [2] : vector<2x8x8xf32> to vector<2x8xf32>
    %220 = vector.shape_cast %219 : vector<2x8xf32> to vector<2x8x1xf32>
    %221 = vector.broadcast %220 : vector<2x8x1xf32> to vector<2x8x8xf32>
    %222 = arith.subf %218, %221 : vector<2x8x8xf32>
    %223 = math.exp %222 : vector<2x8x8xf32>
    %cst_72 = arith.constant dense<0.000000e+00> : vector<2x8xf32>
    %224 = vector.multi_reduction <add>, %223, %cst_72 [2] : vector<2x8x8xf32> to vector<2x8xf32>
    %225 = vector.shape_cast %224 : vector<2x8xf32> to vector<2x8x1xf32>
    %226 = tpu.reciprocal %225 {approx = true} : vector<2x8x1xf32> -> vector<2x8x1xf32>
    %227 = vector.broadcast %226 : vector<2x8x1xf32> to vector<2x8x8xf32>
    %228 = arith.mulf %223, %227 : vector<2x8x8xf32>
    %229 = arith.truncf %228 : vector<2x8x8xf32> to vector<2x8x8xbf16>
    %230 = arith.truncf %211 : vector<2x8x16xf32> to vector<2x8x16xbf16>
    "tpu.trace_start"() <{level = 10 : i32, message = "bqk,bkd->bqd"}> : () -> ()
    %cst_73 = arith.constant dense<0.000000e+00> : vector<2x8x16xf32>
    %231 = tpu.matmul %229, %230, %cst_73 {dimension_numbers = #tpu.dot_dimension_numbers<[2], [1], [1], [2], [0, 0, 0, 1, 1, 2], [0], [0]>} : vector<2x8x8xbf16>, vector<2x8x16xbf16>, vector<2x8x16xf32> -> vector<2x8x16xf32>
    "tpu.trace_stop"() : () -> ()
    %232 = vector.shape_cast %231 : vector<2x8x16xf32> to vector<16x16xf32>
    %233 = tpu.concatenate %205, %232 in 1 : vector<16x16xf32>, vector<16x16xf32> -> vector<16x32xf32>
    %234 = arith.truncf %233 : vector<16x32xf32> to vector<16x32xbf16>
    %c1_74 = arith.constant 1 : index
    %c0_75 = arith.constant 0 : index
    %c0_76 = arith.constant 0 : index
    %235 = vector.load %arg4[%c1_74, %c0_75, %c0_76] : memref<2x32x32xbf16, #tpu.memory_space<vmem>>, vector<1x32x32xbf16>
    %236 = vector.shape_cast %235 : vector<1x32x32xbf16> to vector<32x32xbf16>
    %cst_77 = arith.constant dense<0.000000e+00> : vector<16x32xf32>
    %237 = tpu.matmul %234, %236, %cst_77 {dimension_numbers = #tpu.dot_dimension_numbers<[1], [0], [0], [1], [0, 0, 1, 1], [], []>} : vector<16x32xbf16>, vector<32x32xbf16>, vector<16x32xf32> -> vector<16x32xf32>
    %c13 = arith.constant 13 : index
    %c0_78 = arith.constant 0 : index
    %238 = vector.load %arg2[%c13, %c0_78] : memref<22x128xf32, #tpu.memory_space<vmem>>, vector<1x32xf32>
    %239 = vector.broadcast %238 : vector<1x32xf32> to vector<16x32xf32>
    %240 = arith.addf %237, %239 : vector<16x32xf32>
    %241 = arith.addf %171, %240 : vector<16x32xf32>
    %c14 = arith.constant 14 : index
    %c0_79 = arith.constant 0 : index
    %242 = vector.load %arg2[%c14, %c0_79] : memref<22x128xf32, #tpu.memory_space<vmem>>, vector<1x32xf32>
    %c15 = arith.constant 15 : index
    %c0_80 = arith.constant 0 : index
    %243 = vector.load %arg2[%c15, %c0_80] : memref<22x128xf32, #tpu.memory_space<vmem>>, vector<1x32xf32>
    %cst_81 = arith.constant dense<0.000000e+00> : vector<16xf32>
    %244 = vector.multi_reduction <add>, %241, %cst_81 [1] : vector<16x32xf32> to vector<16xf32>
    %245 = vector.shape_cast %244 : vector<16xf32> to vector<16x1xf32>
    %cst_82 = arith.constant 3.200000e+01 : f32
    %246 = vector.broadcast %cst_82 : f32 to vector<16x1xf32>
    %247 = arith.divf %245, %246 : vector<16x1xf32>
    %248 = vector.broadcast %247 : vector<16x1xf32> to vector<16x32xf32>
    %249 = arith.subf %241, %248 : vector<16x32xf32>
    %250 = arith.mulf %249, %249 : vector<16x32xf32>
    %cst_83 = arith.constant dense<0.000000e+00> : vector<16xf32>
    %251 = vector.multi_reduction <add>, %250, %cst_83 [1] : vector<16x32xf32> to vector<16xf32>
    %252 = vector.shape_cast %251 : vector<16xf32> to vector<16x1xf32>
    %cst_84 = arith.constant 3.200000e+01 : f32
    %253 = vector.broadcast %cst_84 : f32 to vector<16x1xf32>
    %254 = arith.divf %252, %253 : vector<16x1xf32>
    %255 = vector.broadcast %247 : vector<16x1xf32> to vector<16x32xf32>
    %256 = arith.subf %241, %255 : vector<16x32xf32>
    %cst_85 = arith.constant 9.99999996E-13 : f32
    %257 = vector.broadcast %cst_85 : f32 to vector<16x1xf32>
    %258 = arith.addf %254, %257 : vector<16x1xf32>
    %259 = math.rsqrt %258 : vector<16x1xf32>
    %260 = vector.broadcast %259 : vector<16x1xf32> to vector<16x32xf32>
    %261 = arith.mulf %256, %260 : vector<16x32xf32>
    %262 = vector.broadcast %242 : vector<1x32xf32> to vector<16x32xf32>
    %263 = arith.mulf %261, %262 : vector<16x32xf32>
    %264 = vector.broadcast %243 : vector<1x32xf32> to vector<16x32xf32>
    %265 = arith.addf %263, %264 : vector<16x32xf32>
    %266 = arith.truncf %265 : vector<16x32xf32> to vector<16x32xbf16>
    %c1_86 = arith.constant 1 : index
    %c0_87 = arith.constant 0 : index
    %c0_88 = arith.constant 0 : index
    %267 = vector.load %arg5[%c1_86, %c0_87, %c0_88] : memref<2x32x128xbf16, #tpu.memory_space<vmem>>, vector<1x32x128xbf16>
    %268 = vector.shape_cast %267 : vector<1x32x128xbf16> to vector<32x128xbf16>
    %cst_89 = arith.constant dense<0.000000e+00> : vector<16x128xf32>
    %269 = tpu.matmul %266, %268, %cst_89 {dimension_numbers = #tpu.dot_dimension_numbers<[1], [0], [0], [1], [0, 0, 1, 1], [], []>} : vector<16x32xbf16>, vector<32x128xbf16>, vector<16x128xf32> -> vector<16x128xf32>
    %c16 = arith.constant 16 : index
    %c0_90 = arith.constant 0 : index
    %270 = vector.load %arg2[%c16, %c0_90] : memref<22x128xf32, #tpu.memory_space<vmem>>, vector<1x128xf32>
    %271 = vector.broadcast %270 : vector<1x128xf32> to vector<16x128xf32>
    %272 = arith.addf %269, %271 : vector<16x128xf32>
    %cst_91 = arith.constant 5.000000e-01 : f32
    %273 = vector.broadcast %cst_91 : f32 to vector<16x128xf32>
    %274 = arith.mulf %273, %272 : vector<16x128xf32>
    %cst_92 = arith.constant 4.471500e-02 : f32
    %275 = vector.broadcast %cst_92 : f32 to vector<16x128xf32>
    %276 = arith.mulf %275, %272 : vector<16x128xf32>
    %277 = arith.mulf %276, %272 : vector<16x128xf32>
    %278 = arith.mulf %277, %272 : vector<16x128xf32>
    %279 = arith.addf %272, %278 : vector<16x128xf32>
    %cst_93 = arith.constant 0.797884583 : f32
    %280 = vector.broadcast %cst_93 : f32 to vector<16x128xf32>
    %281 = arith.mulf %280, %279 : vector<16x128xf32>
    %282 = math.tanh %281 : vector<16x128xf32>
    %cst_94 = arith.constant 1.000000e+00 : f32
    %283 = vector.broadcast %cst_94 : f32 to vector<16x128xf32>
    %284 = arith.addf %283, %282 : vector<16x128xf32>
    %285 = arith.mulf %274, %284 : vector<16x128xf32>
    %286 = arith.truncf %285 : vector<16x128xf32> to vector<16x128xbf16>
    %c1_95 = arith.constant 1 : index
    %c0_96 = arith.constant 0 : index
    %c0_97 = arith.constant 0 : index
    %287 = vector.load %arg6[%c1_95, %c0_96, %c0_97] : memref<2x128x32xbf16, #tpu.memory_space<vmem>>, vector<1x128x32xbf16>
    %288 = vector.shape_cast %287 : vector<1x128x32xbf16> to vector<128x32xbf16>
    %cst_98 = arith.constant dense<0.000000e+00> : vector<16x32xf32>
    %289 = tpu.matmul %286, %288, %cst_98 {dimension_numbers = #tpu.dot_dimension_numbers<[1], [0], [0], [1], [0, 0, 1, 1], [], []>} : vector<16x128xbf16>, vector<128x32xbf16>, vector<16x32xf32> -> vector<16x32xf32>
    %c17 = arith.constant 17 : index
    %c0_99 = arith.constant 0 : index
    %290 = vector.load %arg2[%c17, %c0_99] : memref<22x128xf32, #tpu.memory_space<vmem>>, vector<1x32xf32>
    %291 = vector.broadcast %290 : vector<1x32xf32> to vector<16x32xf32>
    %292 = arith.addf %289, %291 : vector<16x32xf32>
    %293 = arith.addf %265, %292 : vector<16x32xf32>
    %c18 = arith.constant 18 : index
    %c0_100 = arith.constant 0 : index
    %294 = vector.load %arg2[%c18, %c0_100] : memref<22x128xf32, #tpu.memory_space<vmem>>, vector<1x32xf32>
    %c19 = arith.constant 19 : index
    %c0_101 = arith.constant 0 : index
    %295 = vector.load %arg2[%c19, %c0_101] : memref<22x128xf32, #tpu.memory_space<vmem>>, vector<1x32xf32>
    %cst_102 = arith.constant dense<0.000000e+00> : vector<16xf32>
    %296 = vector.multi_reduction <add>, %293, %cst_102 [1] : vector<16x32xf32> to vector<16xf32>
    %297 = vector.shape_cast %296 : vector<16xf32> to vector<16x1xf32>
    %cst_103 = arith.constant 3.200000e+01 : f32
    %298 = vector.broadcast %cst_103 : f32 to vector<16x1xf32>
    %299 = arith.divf %297, %298 : vector<16x1xf32>
    %300 = vector.broadcast %299 : vector<16x1xf32> to vector<16x32xf32>
    %301 = arith.subf %293, %300 : vector<16x32xf32>
    %302 = arith.mulf %301, %301 : vector<16x32xf32>
    %cst_104 = arith.constant dense<0.000000e+00> : vector<16xf32>
    %303 = vector.multi_reduction <add>, %302, %cst_104 [1] : vector<16x32xf32> to vector<16xf32>
    %304 = vector.shape_cast %303 : vector<16xf32> to vector<16x1xf32>
    %cst_105 = arith.constant 3.200000e+01 : f32
    %305 = vector.broadcast %cst_105 : f32 to vector<16x1xf32>
    %306 = arith.divf %304, %305 : vector<16x1xf32>
    %307 = vector.broadcast %299 : vector<16x1xf32> to vector<16x32xf32>
    %308 = arith.subf %293, %307 : vector<16x32xf32>
    %cst_106 = arith.constant 9.99999996E-13 : f32
    %309 = vector.broadcast %cst_106 : f32 to vector<16x1xf32>
    %310 = arith.addf %306, %309 : vector<16x1xf32>
    %311 = math.rsqrt %310 : vector<16x1xf32>
    %312 = vector.broadcast %311 : vector<16x1xf32> to vector<16x32xf32>
    %313 = arith.mulf %308, %312 : vector<16x32xf32>
    %314 = vector.broadcast %294 : vector<1x32xf32> to vector<16x32xf32>
    %315 = arith.mulf %313, %314 : vector<16x32xf32>
    %316 = vector.broadcast %295 : vector<1x32xf32> to vector<16x32xf32>
    %317 = arith.addf %315, %316 : vector<16x32xf32>
    %318 = vector.shape_cast %317 : vector<16x32xf32> to vector<2x8x32xf32>
    %319 = vector.extract_strided_slice %318 {offsets = [0, 0, 0], sizes = [2, 1, 32], strides = [1, 1, 1]} : vector<2x8x32xf32> to vector<2x1x32xf32>
    %320 = vector.shape_cast %319 : vector<2x1x32xf32> to vector<2x32xf32>
    %321 = arith.truncf %320 : vector<2x32xf32> to vector<2x32xbf16>
    %c0_107 = arith.constant 0 : index
    %c0_108 = arith.constant 0 : index
    %322 = vector.load %arg7[%c0_107, %c0_108] : memref<32x32xbf16, #tpu.memory_space<vmem>>, vector<32x32xbf16>
    %cst_109 = arith.constant dense<0.000000e+00> : vector<2x32xf32>
    %323 = tpu.matmul %321, %322, %cst_109 {dimension_numbers = #tpu.dot_dimension_numbers<[1], [0], [0], [1], [0, 0, 1, 1], [], []>} : vector<2x32xbf16>, vector<32x32xbf16>, vector<2x32xf32> -> vector<2x32xf32>
    %c2 = arith.constant 2 : index
    %c0_110 = arith.constant 0 : index
    %324 = vector.load %arg2[%c2, %c0_110] : memref<22x128xf32, #tpu.memory_space<vmem>>, vector<1x32xf32>
    %325 = vector.broadcast %324 : vector<1x32xf32> to vector<2x32xf32>
    %326 = arith.addf %323, %325 : vector<2x32xf32>
    %327 = math.tanh %326 : vector<2x32xf32>
    %c20 = arith.constant 20 : index
    %c0_111 = arith.constant 0 : index
    %328 = vector.load %arg2[%c20, %c0_111] : memref<22x128xf32, #tpu.memory_space<vmem>>, vector<2x32xf32>
    %329 = arith.mulf %327, %328 : vector<2x32xf32>
    %330 = arith.truncf %329 : vector<2x32xf32> to vector<2x32xbf16>
    %c0_112 = arith.constant 0 : index
    %c0_113 = arith.constant 0 : index
    %331 = vector.load %arg8[%c0_112, %c0_113] : memref<32x128xbf16, #tpu.memory_space<vmem>>, vector<32x128xbf16>
    %cst_114 = arith.constant dense<0.000000e+00> : vector<2x128xf32>
    %332 = tpu.matmul %330, %331, %cst_114 {dimension_numbers = #tpu.dot_dimension_numbers<[1], [0], [0], [1], [0, 0, 1, 1], [], []>} : vector<2x32xbf16>, vector<32x128xbf16>, vector<2x128xf32> -> vector<2x128xf32>
    %c3 = arith.constant 3 : index
    %c0_115 = arith.constant 0 : index
    %333 = vector.load %arg2[%c3, %c0_115] : memref<22x128xf32, #tpu.memory_space<vmem>>, vector<1x128xf32>
    %334 = vector.broadcast %333 : vector<1x128xf32> to vector<2x128xf32>
    %335 = arith.addf %332, %334 : vector<2x128xf32>
    %c0_116 = arith.constant 0 : index
    %c0_117 = arith.constant 0 : index
    %336 = vector.load %arg9[%c0_116, %c0_117] : memref<2x128xf32, #tpu.memory_space<vmem>>, vector<2x128xf32>
    tpu.vector_store %arg9[%c0_116, %c0_117], %335 {strides = array<i32>} : memref<2x128xf32, #tpu.memory_space<vmem>>, vector<2x128xf32>,
    return
  }
}

</mosaic_0001>

<llo_original>
// kernel: sentiment_classifier_forward.1
$region0: #{sentiment_classifier_forward.1}
  #allocation0 [shape = 'u32[]', space=smem, size = 0x4, offset = 0x4, fixed_abs, tag = 'smem constant byte address 0x4 - core index']
  #allocation1 [shape = 'u32[144,128]{1,0:T(1,128)}', space=vmem, size = 0x12000, scoped, tag = 'internal scratch']
  %s0 = inlined_call_operand.vmem [shape: f32[16,32], index: 0, kind: input, shape index: {}]
  %s1 = inlined_call_operand.vmem [shape: f32[2,1,8], index: 1, kind: input, shape index: {}]
  %s2 = inlined_call_operand.vmem [shape: f32[22,128], index: 2, kind: input, shape index: {}]
  %s3 = inlined_call_operand.vmem [shape: bf16[2,32,96], index: 3, kind: input, shape index: {}]
  %s4 = inlined_call_operand.vmem [shape: bf16[2,32,32], index: 4, kind: input, shape index: {}]
  %s5 = inlined_call_operand.vmem [shape: bf16[2,32,128], index: 5, kind: input, shape index: {}]
  %s6 = inlined_call_operand.vmem [shape: bf16[2,128,32], index: 6, kind: input, shape index: {}]
  %s7 = inlined_call_operand.vmem [shape: bf16[32,32], index: 7, kind: input, shape index: {}]
  %s8 = inlined_call_operand.vmem [shape: bf16[32,128], index: 8, kind: input, shape index: {}]
  %s9 = inlined_call_operand.hbm [shape: f32[2,128], index: 9, kind: output, shape index: {}]
  %s10 = sld [smem:[#allocation0]]
  $region46: #{sentiment_classifier_forward.1} parent=0
    _
  %s12 = ssub.s32 1, %s10
  %s13 = scalar_select 0, %s12, %s10
  $region1: #{sentiment_classifier_forward.1} parent=0
    #allocation2 [shape = 'u8[1024]{0}', space=vmem, size = 0x400, scoped, tag = 'output window, operand 0, single buffered']
    #allocation3 [shape = 's32[1]{0}', space=sflag, size = 0x4, scoped, tag = 'scoped memory for sentiment_classifier_forward.1']
    %14 = vsyncpa [#allocation3], 0
    // Predicated region
    $region2: #{sentiment_classifier_forward.1} parent=1 // pred_check
      _
    $region3: #{sentiment_classifier_forward.1} parent=1 // pred_check_branch
      %16 = sbr.rel (0) target = $region5
    $region4: #{sentiment_classifier_forward.1} parent=1 // pred_region
      _
    $region5: #{sentiment_classifier_forward.1} parent=1 // pred_fallthru
      _
    // Predicated region
    $region6: #{sentiment_classifier_forward.1} parent=1 // pred_check
      _
    $region7: #{sentiment_classifier_forward.1} parent=1 // pred_check_branch
      %18 = sbr.rel (0) target = $region9
    $region8: #{sentiment_classifier_forward.1} parent=1 // pred_region
      _
    $region9: #{sentiment_classifier_forward.1} parent=1 // pred_fallthru
      _
    // Predicated region
    $region10: #{sentiment_classifier_forward.1} parent=1 // pred_check
      _
    $region11: #{sentiment_classifier_forward.1} parent=1 // pred_check_branch
      %20 = sbr.rel (0) target = $region13
    $region12: #{sentiment_classifier_forward.1} parent=1 // pred_region
      _
    $region13: #{sentiment_classifier_forward.1} parent=1 // pred_fallthru
      _
    // Predicated region
    $region14: #{sentiment_classifier_forward.1} parent=1 // pred_check
      _
    $region15: #{sentiment_classifier_forward.1} parent=1 // pred_check_branch
      %22 = sbr.rel (0) target = $region17
    $region16: #{sentiment_classifier_forward.1} parent=1 // pred_region
      _
    $region17: #{sentiment_classifier_forward.1} parent=1 // pred_fallthru
      _
    // Predicated region
    $region18: #{sentiment_classifier_forward.1} parent=1 // pred_check
      _
    $region19: #{sentiment_classifier_forward.1} parent=1 // pred_check_branch
      %24 = sbr.rel (0) target = $region21
    $region20: #{sentiment_classifier_forward.1} parent=1 // pred_region
      _
    $region21: #{sentiment_classifier_forward.1} parent=1 // pred_fallthru
      _
    // Predicated region
    $region22: #{sentiment_classifier_forward.1} parent=1 // pred_check
      _
    $region23: #{sentiment_classifier_forward.1} parent=1 // pred_check_branch
      %26 = sbr.rel (0) target = $region25
    $region24: #{sentiment_classifier_forward.1} parent=1 // pred_region
      _
    $region25: #{sentiment_classifier_forward.1} parent=1 // pred_fallthru
      _
    // Predicated region
    $region26: #{sentiment_classifier_forward.1} parent=1 // pred_check
      _
    $region27: #{sentiment_classifier_forward.1} parent=1 // pred_check_branch
      %28 = sbr.rel (0) target = $region29
    $region28: #{sentiment_classifier_forward.1} parent=1 // pred_region
      _
    $region29: #{sentiment_classifier_forward.1} parent=1 // pred_fallthru
      _
    // Predicated region
    $region30: #{sentiment_classifier_forward.1} parent=1 // pred_check
      _
    $region31: #{sentiment_classifier_forward.1} parent=1 // pred_check_branch
      %30 = sbr.rel (0) target = $region33
    $region32: #{sentiment_classifier_forward.1} parent=1 // pred_region
      _
    $region33: #{sentiment_classifier_forward.1} parent=1 // pred_fallthru
      _
    // Predicated region
    $region34: #{sentiment_classifier_forward.1} parent=1 // pred_check
      _
    $region35: #{sentiment_classifier_forward.1} parent=1 // pred_check_branch
      %32 = sbr.rel (0) target = $region37
    $region36: #{sentiment_classifier_forward.1} parent=1 // pred_region
      _
    $region37: #{sentiment_classifier_forward.1} parent=1 // pred_fallthru
      _
    %v34 = vld [vmem:[%s0] sm:$0xff]
    %v35 = vld [vmem:[%s0 + $0x8] sm:$0xff]
    %v36 = vld [vmem:[%s2] sm:$0x1]
    %v37 = vld [vmem:[%s2 + $0x1] sm:$0x1]
    %vm38 = vcmask 261120
    %v39 = vsel %vm38, %v34, 0.0
    %40 = vadd.xlane.f32.xlu0 %v39
    %v41 = vpop.xlane.xlu0 %40
    %v42 = vsel %vm38, %v35, 0.0
    %43 = vadd.xlane.f32.xlu0 %v42
    %v44 = vpop.xlane.xlu0 %43
    %v45 = vrcp.pop 32.0
    %v46 = vmul.f32 %v41, %v45
    %v47 = vmul.f32 %v44, %v45
    %v48 = vsub.f32 %v34, %v46
    %v49 = vsub.f32 %v35, %v47
    %v50 = vmul.f32 %v48, %v48
    %v51 = vmul.f32 %v49, %v49
    %v52 = vsel %vm38, %v50, 0.0
    %53 = vadd.xlane.f32.xlu0 %v52
    %v54 = vpop.xlane.xlu0 %53
    %v55 = vsel %vm38, %v51, 0.0
    %56 = vadd.xlane.f32.xlu0 %v55
    %v57 = vpop.xlane.xlu0 %56
    %v58 = vmul.f32 %v54, %v45
    %v59 = vmul.f32 %v57, %v45
    %v60 = vadd.f32 %v58, 1e-12
    %v61 = vadd.f32 %v59, 1e-12
    %v62 = vrsqrt.pop %v60
    %v63 = vrsqrt.pop %v61
    %v64 = vmul.f32 %v48, %v62
    %v65 = vmul.f32 %v49, %v63
    %v66 = vlaneseq
    %v67 = vshrl.u32 %v66, 7
    %v68 = vsub.s32 0, %v67
    %v69 = vrot.slane %v36, %v68
    %v70 = vmul.f32 %v64, %v69
    %v71 = vmul.f32 %v65, %v69
    %v72 = vlaneseq
    %v73 = vshrl.u32 %v72, 7
    %v74 = vsub.s32 0, %v73
    %v75 = vrot.slane %v37, %v74
    %v76 = vadd.f32 %v70, %v75
    %v77 = vadd.f32 %v71, %v75
    %v78 = vld [vmem:[%s1] sm:$0x1]
    %v79 = vld [vmem:[%s1 + $0x1] sm:$0x1]
    %v80 = vpack.c.bf16 %v77, %v76
    %v81 = vld [vmem:[%s3] sm:$0xf]
    %v82 = vld [vmem:[%s3 + $0x4] sm:$0xf]
    %v83 = vld [vmem:[%s3 + $0x8] sm:$0xf]
    %v84 = vld [vmem:[%s3 + $0xc] sm:$0xf]
    %v85 = vld [vmem:[%s2 + $0x4] sm:$0x1]
    %v86 = vlaneseq
    %v87 = vshrl.u32 %v86, 7
    %v88 = vsub.s32 0, %v87
    %v89 = vrot.slane %v85, %v88
    %v94 = vunpack.c.l.b16 %v81
    %v95 = vunpack.c.l.b16 %v82
    %v96 = vunpack.c.l.b16 %v83
    %v97 = vunpack.c.l.b16 %v84
    %v98 = vpack.c.b16 %v95, %v94
    %v99 = vpack.c.b16 %v97, %v96
    %v103 = vsel %vm38, %v80, 0
    %105 = vmatprep.subr.bf16.mxu0 0
    %106 = vmatpush1.bf16.msra.mxu0 0
    %107 = vmatprep.subr.bf16.mxu0 0
    %108 = vmatpush1.bf16.msra.mxu0 0
    %109 = vmatprep.subr.bf16.mxu0 0
    %110 = vmatpush1.bf16.msra.mxu0 0
    %111 = vmatprep.subr.bf16.mxu0 0
    %112 = vmatpush1.bf16.msra.mxu0 0
    %113 = vmatprep.subr.bf16.mxu0 0
    %114 = vmatpush1.bf16.msra.mxu0 0
    %115 = vmatprep.subr.bf16.mxu0 0
    %116 = vmatpush1.bf16.msra.mxu0 0
    %117 = vmatprep.subr.bf16.mxu0 0
    %118 = vmatpush1.bf16.msra.mxu0 %v99
    %119 = vmatprep.subr.bf16.mxu0 0
    %120 = vmatpush1.bf16.msra.mxu0 %v98
    %121 = vmatprep.subr.bf16.mxu0 0
    %122 = vmatpush2.bf16.msra.mxu0 0
    %123 = vmatprep.subr.bf16.mxu0 0
    %124 = vmatpush2.bf16.msra.mxu0 0
    %125 = vmatprep.subr.bf16.mxu0 0
    %126 = vmatpush2.bf16.msra.mxu0 0
    %127 = vmatprep.subr.bf16.mxu0 0
    %128 = vmatpush2.bf16.msra.mxu0 0
    %129 = vmatprep.subr.bf16.mxu0 0
    %130 = vmatpush2.bf16.msra.mxu0 0
    %131 = vmatprep.subr.bf16.mxu0 0
    %132 = vmatpush2.bf16.msra.mxu0 0
    %133 = vmatprep.subr.bf16.mxu0 0
    %134 = vmatpush2.bf16.msra.mxu0 0
    %135 = vmatprep.subr.bf16.mxu0 0
    %136 = vmatpush2.bf16.msra.mxu0 0
    %137 = vmatprep.mubr.bf16.mxu0 0
    %138 = vmatmul.mubr.bf16.gmra.mxu0 %v103
    %v139 = vpop.f32.mrf.mxu0
    %v140 = vadd.f32 %v89, %v139
    %v141 = vpop.f32.mrf.mxu0
    %v142 = vpop.f32.mrf.mxu0
    %v143 = vadd.f32 %v89, %v142
    %v144 = vpop.f32.mrf.mxu0
    %145 = vdwg.mxu0
    %v146 = vpack.c.bf16 %v140, %v140
    %v147 = vpack.c.bf16 %v143, %v143
    %149 = vrot.lane.b32.xlu0 %v146, 96
    %v150 = vpop.permute.xlu0 %149
    %vm151 = vcmask 130048
    %v153 = vsel %vm151, %v146, 0
    %v156 = vsel %vm151, %v150, 0
    %158 = vmatprep.subr.bf16.mxu0 0
    %159 = vmatpush1.bf16.xpose.msra.mxu0 0
    %160 = vmatprep.subr.bf16.mxu0 0
    %161 = vmatpush1.bf16.xpose.msra.mxu0 0
    %162 = vmatprep.subr.bf16.mxu0 0
    %163 = vmatpush1.bf16.xpose.msra.mxu0 0
    %164 = vmatprep.subr.bf16.mxu0 0
    %165 = vmatpush1.bf16.xpose.msra.mxu0 0
    %166 = vmatprep.subr.bf16.mxu0 0
    %167 = vmatpush1.bf16.xpose.msra.mxu0 0
    %168 = vmatprep.subr.bf16.mxu0 0
    %169 = vmatpush1.bf16.xpose.msra.mxu0 0
    %170 = vmatprep.subr.bf16.mxu0 0
    %171 = vmatpush1.bf16.xpose.msra.mxu0 0
    %172 = vmatprep.subr.bf16.mxu0 0
    %173 = vmatpush1.bf16.xpose.msra.mxu0 %v156
    %174 = vmatprep.subr.bf16.mxu0 0
    %175 = vmatpush2.bf16.xpose.msra.mxu0 0
    %176 = vmatprep.subr.bf16.mxu0 0
    %177 = vmatpush2.bf16.xpose.msra.mxu0 0
    %178 = vmatprep.subr.bf16.mxu0 0
    %179 = vmatpush2.bf16.xpose.msra.mxu0 0
    %180 = vmatprep.subr.bf16.mxu0 0
    %181 = vmatpush2.bf16.xpose.msra.mxu0 0
    %182 = vmatprep.subr.bf16.mxu0 0
    %183 = vmatpush2.bf16.xpose.msra.mxu0 0
    %184 = vmatprep.subr.bf16.mxu0 0
    %185 = vmatpush2.bf16.xpose.msra.mxu0 0
    %186 = vmatprep.subr.bf16.mxu0 0
    %187 = vmatpush2.bf16.xpose.msra.mxu0 0
    %188 = vmatprep.subr.bf16.mxu0 0
    %189 = vmatpush2.bf16.xpose.msra.mxu0 0
    %190 = vmatprep.mubr.bf16.mxu0 0
    %191 = vmatmul.mubr.bf16.gmra.mxu0 %v153
    %v192 = vpop.f32.mrf.mxu0
    %v193 = vadd.f32 0.0, %v192
    %v194 = vpop.f32.mrf.mxu0
    %v195 = vpop.f32.mrf.mxu0
    %v196 = vpop.f32.mrf.mxu0
    %197 = vdwg.mxu0
    %199 = vrot.lane.b32.xlu0 %v147, 96
    %v200 = vpop.permute.xlu0 %199
    %v202 = vsel %vm151, %v147, 0
    %v205 = vsel %vm151, %v200, 0
    %207 = vmatprep.subr.bf16.mxu0 0
    %208 = vmatpush1.bf16.xpose.msra.mxu0 0
    %209 = vmatprep.subr.bf16.mxu0 0
    %210 = vmatpush1.bf16.xpose.msra.mxu0 0
    %211 = vmatprep.subr.bf16.mxu0 0
    %212 = vmatpush1.bf16.xpose.msra.mxu0 0
    %213 = vmatprep.subr.bf16.mxu0 0
    %214 = vmatpush1.bf16.xpose.msra.mxu0 0
    %215 = vmatprep.subr.bf16.mxu0 0
    %216 = vmatpush1.bf16.xpose.msra.mxu0 0
    %217 = vmatprep.subr.bf16.mxu0 0
    %218 = vmatpush1.bf16.xpose.msra.mxu0 0
    %219 = vmatprep.subr.bf16.mxu0 0
    %220 = vmatpush1.bf16.xpose.msra.mxu0 0
    %221 = vmatprep.subr.bf16.mxu0 0
    %222 = vmatpush1.bf16.xpose.msra.mxu0 %v205
    %223 = vmatprep.subr.bf16.mxu0 0
    %224 = vmatpush2.bf16.xpose.msra.mxu0 0
    %225 = vmatprep.subr.bf16.mxu0 0
    %226 = vmatpush2.bf16.xpose.msra.mxu0 0
    %227 = vmatprep.subr.bf16.mxu0 0
    %228 = vmatpush2.bf16.xpose.msra.mxu0 0
    %229 = vmatprep.subr.bf16.mxu0 0
    %230 = vmatpush2.bf16.xpose.msra.mxu0 0
    %231 = vmatprep.subr.bf16.mxu0 0
    %232 = vmatpush2.bf16.xpose.msra.mxu0 0
    %233 = vmatprep.subr.bf16.mxu0 0
    %234 = vmatpush2.bf16.xpose.msra.mxu0 0
    %235 = vmatprep.subr.bf16.mxu0 0
    %236 = vmatpush2.bf16.xpose.msra.mxu0 0
    %237 = vmatprep.subr.bf16.mxu0 0
    %238 = vmatpush2.bf16.xpose.msra.mxu0 0
    %239 = vmatprep.mubr.bf16.mxu0 0
    %240 = vmatmul.mubr.bf16.gmra.mxu0 %v202
    %v241 = vpop.f32.mrf.mxu0
    %v242 = vadd.f32 0.0, %v241
    %v243 = vpop.f32.mrf.mxu0
    %v244 = vpop.f32.mrf.mxu0
    %v245 = vpop.f32.mrf.mxu0
    %246 = vdwg.mxu0
    %v247 = vmul.f32 %v193, 0.25
    %v248 = vmul.f32 %v242, 0.25
    %v251 = vlaneseq
    %v252 = vshrl.u32 %v251, 7
    %v253 = vsub.s32 0, %v252
    %v254 = vrot.slane %v78, %v253
    %v255 = vlaneseq
    %v256 = vshrl.u32 %v255, 7
    %v257 = vsub.s32 0, %v256
    %v258 = vrot.slane %v79, %v257
    %v261 = vadd.f32 %v247, %v254
    %v262 = vadd.f32 %v248, %v258
    %vm263 = vcmask 64512
    %v264 = vsel %vm263, %v261, -inf
    %265 = vmax.xlane.f32.xlu0 %v264
    %v266 = vpop.xlane.xlu0 %265
    %v267 = vsel %vm263, %v262, -inf
    %268 = vmax.xlane.f32.xlu0 %v267
    %v269 = vpop.xlane.xlu0 %268
    %v270 = vsub.f32 %v261, %v266
    %v271 = vsub.f32 %v262, %v269
    %v272 = vmul.f32 %v270, 1.442695
    %v273 = vpow.pop %v272
    %v274 = vmul.f32 %v271, 1.442695
    %v275 = vpow.pop %v274
    %v276 = vsel %vm263, %v273, 0.0
    %277 = vadd.xlane.f32.xlu0 %v276
    %v278 = vpop.xlane.xlu0 %277
    %v279 = vsel %vm263, %v275, 0.0
    %280 = vadd.xlane.f32.xlu0 %v279
    %v281 = vpop.xlane.xlu0 %280
    %v282 = vrcp.pop %v278
    %v283 = vrcp.pop %v281
    %v284 = vmul.f32 %v273, %v282
    %v285 = vmul.f32 %v275, %v283
    %v286 = vpack.c.bf16 %v284, %v284
    %v287 = vpack.c.bf16 %v285, %v285
    %288 = vrot.lane.b32.xlu0 %v146, 64
    %v289 = vpop.permute.xlu0 %288
    %v291 = vsel %vm263, %v286, 0
    %vm293 = vcmask 1043456
    %v295 = vsel %vm293, %v289, 0
    %297 = vmatprep.subr.bf16.mxu0 0
    %298 = vmatpush1.bf16.msra.mxu0 0
    %299 = vmatprep.subr.bf16.mxu0 0
    %300 = vmatpush1.bf16.msra.mxu0 0
    %301 = vmatprep.subr.bf16.mxu0 0
    %302 = vmatpush1.bf16.msra.mxu0 0
    %303 = vmatprep.subr.bf16.mxu0 0
    %304 = vmatpush1.bf16.msra.mxu0 0
    %305 = vmatprep.subr.bf16.mxu0 0
    %306 = vmatpush1.bf16.msra.mxu0 0
    %307 = vmatprep.subr.bf16.mxu0 0
    %308 = vmatpush1.bf16.msra.mxu0 0
    %309 = vmatprep.subr.bf16.mxu0 0
    %310 = vmatpush1.bf16.msra.mxu0 0
    %311 = vmatprep.subr.bf16.mxu0 0
    %312 = vmatpush1.bf16.msra.mxu0 %v295
    %313 = vmatprep.subr.bf16.mxu0 0
    %314 = vmatpush2.bf16.msra.mxu0 0
    %315 = vmatprep.subr.bf16.mxu0 0
    %316 = vmatpush2.bf16.msra.mxu0 0
    %317 = vmatprep.subr.bf16.mxu0 0
    %318 = vmatpush2.bf16.msra.mxu0 0
    %319 = vmatprep.subr.bf16.mxu0 0
    %320 = vmatpush2.bf16.msra.mxu0 0
    %321 = vmatprep.subr.bf16.mxu0 0
    %322 = vmatpush2.bf16.msra.mxu0 0
    %323 = vmatprep.subr.bf16.mxu0 0
    %324 = vmatpush2.bf16.msra.mxu0 0
    %325 = vmatprep.subr.bf16.mxu0 0
    %326 = vmatpush2.bf16.msra.mxu0 0
    %327 = vmatprep.subr.bf16.mxu0 0
    %328 = vmatpush2.bf16.msra.mxu0 0
    %329 = vmatprep.mubr.bf16.mxu0 0
    %330 = vmatmul.mubr.bf16.gmra.mxu0 %v291
    %v331 = vpop.f32.mrf.mxu0
    %v332 = vadd.f32 0.0, %v331
    %v333 = vpop.f32.mrf.mxu0
    %v334 = vpop.f32.mrf.mxu0
    %v335 = vpop.f32.mrf.mxu0
    %336 = vdwg.mxu0
    %337 = vrot.lane.b32.xlu0 %v147, 64
    %v338 = vpop.permute.xlu0 %337
    %v340 = vsel %vm263, %v287, 0
    %v343 = vsel %vm293, %v338, 0
    %345 = vmatprep.subr.bf16.mxu0 0
    %346 = vmatpush1.bf16.msra.mxu0 0
    %347 = vmatprep.subr.bf16.mxu0 0
    %348 = vmatpush1.bf16.msra.mxu0 0
    %349 = vmatprep.subr.bf16.mxu0 0
    %350 = vmatpush1.bf16.msra.mxu0 0
    %351 = vmatprep.subr.bf16.mxu0 0
    %352 = vmatpush1.bf16.msra.mxu0 0
    %353 = vmatprep.subr.bf16.mxu0 0
    %354 = vmatpush1.bf16.msra.mxu0 0
    %355 = vmatprep.subr.bf16.mxu0 0
    %356 = vmatpush1.bf16.msra.mxu0 0
    %357 = vmatprep.subr.bf16.mxu0 0
    %358 = vmatpush1.bf16.msra.mxu0 0
    %359 = vmatprep.subr.bf16.mxu0 0
    %360 = vmatpush1.bf16.msra.mxu0 %v343
    %361 = vmatprep.subr.bf16.mxu0 0
    %362 = vmatpush2.bf16.msra.mxu0 0
    %363 = vmatprep.subr.bf16.mxu0 0
    %364 = vmatpush2.bf16.msra.mxu0 0
    %365 = vmatprep.subr.bf16.mxu0 0
    %366 = vmatpush2.bf16.msra.mxu0 0
    %367 = vmatprep.subr.bf16.mxu0 0
    %368 = vmatpush2.bf16.msra.mxu0 0
    %369 = vmatprep.subr.bf16.mxu0 0
    %370 = vmatpush2.bf16.msra.mxu0 0
    %371 = vmatprep.subr.bf16.mxu0 0
    %372 = vmatpush2.bf16.msra.mxu0 0
    %373 = vmatprep.subr.bf16.mxu0 0
    %374 = vmatpush2.bf16.msra.mxu0 0
    %375 = vmatprep.subr.bf16.mxu0 0
    %376 = vmatpush2.bf16.msra.mxu0 0
    %377 = vmatprep.mubr.bf16.mxu0 0
    %378 = vmatmul.mubr.bf16.gmra.mxu0 %v340
    %v379 = vpop.f32.mrf.mxu0
    %v380 = vadd.f32 0.0, %v379
    %v381 = vpop.f32.mrf.mxu0
    %v382 = vpop.f32.mrf.mxu0
    %v383 = vpop.f32.mrf.mxu0
    %384 = vdwg.mxu0
    %385 = vrot.lane.b32.xlu0 %v146, 112
    %v386 = vpop.permute.xlu0 %385
    %387 = vrot.lane.b32.xlu0 %v146, 80
    %v388 = vpop.permute.xlu0 %387
    %v390 = vsel %vm151, %v386, 0
    %v393 = vsel %vm151, %v388, 0
    %395 = vmatprep.subr.bf16.mxu0 0
    %396 = vmatpush1.bf16.xpose.msra.mxu0 0
    %397 = vmatprep.subr.bf16.mxu0 0
    %398 = vmatpush1.bf16.xpose.msra.mxu0 0
    %399 = vmatprep.subr.bf16.mxu0 0
    %400 = vmatpush1.bf16.xpose.msra.mxu0 0
    %401 = vmatprep.subr.bf16.mxu0 0
    %402 = vmatpush1.bf16.xpose.msra.mxu0 0
    %403 = vmatprep.subr.bf16.mxu0 0
    %404 = vmatpush1.bf16.xpose.msra.mxu0 0
    %405 = vmatprep.subr.bf16.mxu0 0
    %406 = vmatpush1.bf16.xpose.msra.mxu0 0
    %407 = vmatprep.subr.bf16.mxu0 0
    %408 = vmatpush1.bf16.xpose.msra.mxu0 0
    %409 = vmatprep.subr.bf16.mxu0 0
    %410 = vmatpush1.bf16.xpose.msra.mxu0 %v393
    %411 = vmatprep.subr.bf16.mxu0 0
    %412 = vmatpush2.bf16.xpose.msra.mxu0 0
    %413 = vmatprep.subr.bf16.mxu0 0
    %414 = vmatpush2.bf16.xpose.msra.mxu0 0
    %415 = vmatprep.subr.bf16.mxu0 0
    %416 = vmatpush2.bf16.xpose.msra.mxu0 0
    %417 = vmatprep.subr.bf16.mxu0 0
    %418 = vmatpush2.bf16.xpose.msra.mxu0 0
    %419 = vmatprep.subr.bf16.mxu0 0
    %420 = vmatpush2.bf16.xpose.msra.mxu0 0
    %421 = vmatprep.subr.bf16.mxu0 0
    %422 = vmatpush2.bf16.xpose.msra.mxu0 0
    %423 = vmatprep.subr.bf16.mxu0 0
    %424 = vmatpush2.bf16.xpose.msra.mxu0 0
    %425 = vmatprep.subr.bf16.mxu0 0
    %426 = vmatpush2.bf16.xpose.msra.mxu0 0
    %427 = vmatprep.mubr.bf16.mxu0 0
    %428 = vmatmul.mubr.bf16.gmra.mxu0 %v390
    %v429 = vpop.f32.mrf.mxu0
    %v430 = vadd.f32 0.0, %v429
    %v431 = vpop.f32.mrf.mxu0
    %v432 = vpop.f32.mrf.mxu0
    %v433 = vpop.f32.mrf.mxu0
    %434 = vdwg.mxu0
    %435 = vrot.lane.b32.xlu0 %v147, 112
    %v436 = vpop.permute.xlu0 %435
    %437 = vrot.lane.b32.xlu0 %v147, 80
    %v438 = vpop.permute.xlu0 %437
    %v440 = vsel %vm151, %v436, 0
    %v443 = vsel %vm151, %v438, 0
    %445 = vmatprep.subr.bf16.mxu0 0
    %446 = vmatpush1.bf16.xpose.msra.mxu0 0
    %447 = vmatprep.subr.bf16.mxu0 0
    %448 = vmatpush1.bf16.xpose.msra.mxu0 0
    %449 = vmatprep.subr.bf16.mxu0 0
    %450 = vmatpush1.bf16.xpose.msra.mxu0 0
    %451 = vmatprep.subr.bf16.mxu0 0
    %452 = vmatpush1.bf16.xpose.msra.mxu0 0
    %453 = vmatprep.subr.bf16.mxu0 0
    %454 = vmatpush1.bf16.xpose.msra.mxu0 0
    %455 = vmatprep.subr.bf16.mxu0 0
    %456 = vmatpush1.bf16.xpose.msra.mxu0 0
    %457 = vmatprep.subr.bf16.mxu0 0
    %458 = vmatpush1.bf16.xpose.msra.mxu0 0
    %459 = vmatprep.subr.bf16.mxu0 0
    %460 = vmatpush1.bf16.xpose.msra.mxu0 %v443
    %461 = vmatprep.subr.bf16.mxu0 0
    %462 = vmatpush2.bf16.xpose.msra.mxu0 0
    %463 = vmatprep.subr.bf16.mxu0 0
    %464 = vmatpush2.bf16.xpose.msra.mxu0 0
    %465 = vmatprep.subr.bf16.mxu0 0
    %466 = vmatpush2.bf16.xpose.msra.mxu0 0
    %467 = vmatprep.subr.bf16.mxu0 0
    %468 = vmatpush2.bf16.xpose.msra.mxu0 0
    %469 = vmatprep.subr.bf16.mxu0 0
    %470 = vmatpush2.bf16.xpose.msra.mxu0 0
    %471 = vmatprep.subr.bf16.mxu0 0
    %472 = vmatpush2.bf16.xpose.msra.mxu0 0
    %473 = vmatprep.subr.bf16.mxu0 0
    %474 = vmatpush2.bf16.xpose.msra.mxu0 0
    %475 = vmatprep.subr.bf16.mxu0 0
    %476 = vmatpush2.bf16.xpose.msra.mxu0 0
    %477 = vmatprep.mubr.bf16.mxu0 0
    %478 = vmatmul.mubr.bf16.gmra.mxu0 %v440
    %v479 = vpop.f32.mrf.mxu0
    %v480 = vadd.f32 0.0, %v479
    %v481 = vpop.f32.mrf.mxu0
    %v482 = vpop.f32.mrf.mxu0
    %v483 = vpop.f32.mrf.mxu0
    %484 = vdwg.mxu0
    %v485 = vmul.f32 %v430, 0.25
    %v486 = vmul.f32 %v480, 0.25
    %v487 = vadd.f32 %v485, %v254
    %v488 = vadd.f32 %v486, %v258
    %v489 = vsel %vm263, %v487, -inf
    %490 = vmax.xlane.f32.xlu0 %v489
    %v491 = vpop.xlane.xlu0 %490
    %v492 = vsel %vm263, %v488, -inf
    %493 = vmax.xlane.f32.xlu0 %v492
    %v494 = vpop.xlane.xlu0 %493
    %v495 = vsub.f32 %v487, %v491
    %v496 = vsub.f32 %v488, %v494
    %v497 = vmul.f32 %v495, 1.442695
    %v498 = vpow.pop %v497
    %v499 = vmul.f32 %v496, 1.442695
    %v500 = vpow.pop %v499
    %v501 = vsel %vm263, %v498, 0.0
    %502 = vadd.xlane.f32.xlu0 %v501
    %v503 = vpop.xlane.xlu0 %502
    %v504 = vsel %vm263, %v500, 0.0
    %505 = vadd.xlane.f32.xlu0 %v504
    %v506 = vpop.xlane.xlu0 %505
    %v507 = vrcp.pop %v503
    %v508 = vrcp.pop %v506
    %v509 = vmul.f32 %v498, %v507
    %v510 = vmul.f32 %v500, %v508
    %v511 = vpack.c.bf16 %v509, %v509
    %v512 = vpack.c.bf16 %v510, %v510
    %513 = vrot.lane.b32.xlu0 %v146, 48
    %v514 = vpop.permute.xlu0 %513
    %v516 = vsel %vm263, %v511, 0
    %v519 = vsel %vm293, %v514, 0
    %521 = vmatprep.subr.bf16.mxu0 0
    %522 = vmatpush1.bf16.msra.mxu0 0
    %523 = vmatprep.subr.bf16.mxu0 0
    %524 = vmatpush1.bf16.msra.mxu0 0
    %525 = vmatprep.subr.bf16.mxu0 0
    %526 = vmatpush1.bf16.msra.mxu0 0
    %527 = vmatprep.subr.bf16.mxu0 0
    %528 = vmatpush1.bf16.msra.mxu0 0
    %529 = vmatprep.subr.bf16.mxu0 0
    %530 = vmatpush1.bf16.msra.mxu0 0
    %531 = vmatprep.subr.bf16.mxu0 0
    %532 = vmatpush1.bf16.msra.mxu0 0
    %533 = vmatprep.subr.bf16.mxu0 0
    %534 = vmatpush1.bf16.msra.mxu0 0
    %535 = vmatprep.subr.bf16.mxu0 0
    %536 = vmatpush1.bf16.msra.mxu0 %v519
    %537 = vmatprep.subr.bf16.mxu0 0
    %538 = vmatpush2.bf16.msra.mxu0 0
    %539 = vmatprep.subr.bf16.mxu0 0
    %540 = vmatpush2.bf16.msra.mxu0 0
    %541 = vmatprep.subr.bf16.mxu0 0
    %542 = vmatpush2.bf16.msra.mxu0 0
    %543 = vmatprep.subr.bf16.mxu0 0
    %544 = vmatpush2.bf16.msra.mxu0 0
    %545 = vmatprep.subr.bf16.mxu0 0
    %546 = vmatpush2.bf16.msra.mxu0 0
    %547 = vmatprep.subr.bf16.mxu0 0
    %548 = vmatpush2.bf16.msra.mxu0 0
    %549 = vmatprep.subr.bf16.mxu0 0
    %550 = vmatpush2.bf16.msra.mxu0 0
    %551 = vmatprep.subr.bf16.mxu0 0
    %552 = vmatpush2.bf16.msra.mxu0 0
    %553 = vmatprep.mubr.bf16.mxu0 0
    %554 = vmatmul.mubr.bf16.gmra.mxu0 %v516
    %v555 = vpop.f32.mrf.mxu0
    %v556 = vadd.f32 0.0, %v555
    %v557 = vpop.f32.mrf.mxu0
    %v558 = vpop.f32.mrf.mxu0
    %v559 = vpop.f32.mrf.mxu0
    %560 = vdwg.mxu0
    %561 = vrot.lane.b32.xlu0 %v147, 48
    %v562 = vpop.permute.xlu0 %561
    %v564 = vsel %vm263, %v512, 0
    %v567 = vsel %vm293, %v562, 0
    %569 = vmatprep.subr.bf16.mxu0 0
    %570 = vmatpush1.bf16.msra.mxu0 0
    %571 = vmatprep.subr.bf16.mxu0 0
    %572 = vmatpush1.bf16.msra.mxu0 0
    %573 = vmatprep.subr.bf16.mxu0 0
    %574 = vmatpush1.bf16.msra.mxu0 0
    %575 = vmatprep.subr.bf16.mxu0 0
    %576 = vmatpush1.bf16.msra.mxu0 0
    %577 = vmatprep.subr.bf16.mxu0 0
    %578 = vmatpush1.bf16.msra.mxu0 0
    %579 = vmatprep.subr.bf16.mxu0 0
    %580 = vmatpush1.bf16.msra.mxu0 0
    %581 = vmatprep.subr.bf16.mxu0 0
    %582 = vmatpush1.bf16.msra.mxu0 0
    %583 = vmatprep.subr.bf16.mxu0 0
    %584 = vmatpush1.bf16.msra.mxu0 %v567
    %585 = vmatprep.subr.bf16.mxu0 0
    %586 = vmatpush2.bf16.msra.mxu0 0
    %587 = vmatprep.subr.bf16.mxu0 0
    %588 = vmatpush2.bf16.msra.mxu0 0
    %589 = vmatprep.subr.bf16.mxu0 0
    %590 = vmatpush2.bf16.msra.mxu0 0
    %591 = vmatprep.subr.bf16.mxu0 0
    %592 = vmatpush2.bf16.msra.mxu0 0
    %593 = vmatprep.subr.bf16.mxu0 0
    %594 = vmatpush2.bf16.msra.mxu0 0
    %595 = vmatprep.subr.bf16.mxu0 0
    %596 = vmatpush2.bf16.msra.mxu0 0
    %597 = vmatprep.subr.bf16.mxu0 0
    %598 = vmatpush2.bf16.msra.mxu0 0
    %599 = vmatprep.subr.bf16.mxu0 0
    %600 = vmatpush2.bf16.msra.mxu0 0
    %601 = vmatprep.mubr.bf16.mxu0 0
    %602 = vmatmul.mubr.bf16.gmra.mxu0 %v564
    %v603 = vpop.f32.mrf.mxu0
    %v604 = vadd.f32 0.0, %v603
    %v605 = vpop.f32.mrf.mxu0
    %v606 = vpop.f32.mrf.mxu0
    %v607 = vpop.f32.mrf.mxu0
    %608 = vdwg.mxu0
    %611 = vrot.lane.b32.xlu0 %v556, 16
    %v612 = vpop.permute.xlu0 %611
    %613 = vrot.lane.b32.xlu0 %v604, 16
    %v614 = vpop.permute.xlu0 %613
    %v617 = vsel %vm151, %v332, %v612
    %v618 = vsel %vm151, %v380, %v614
    %v619 = vpack.c.bf16 %v618, %v617
    %v620 = vld [vmem:[%s4] sm:$0xf]
    %v621 = vld [vmem:[%s4 + $0x4] sm:$0xf]
    %v622 = vld [vmem:[%s4 + $0x8] sm:$0xf]
    %v623 = vld [vmem:[%s4 + $0xc] sm:$0xf]
    %v624 = vld [vmem:[%s2 + $0x5] sm:$0x1]
    %v625 = vlaneseq
    %v626 = vshrl.u32 %v625, 7
    %v627 = vsub.s32 0, %v626
    %v628 = vrot.slane %v624, %v627
    %v633 = vunpack.c.l.b16 %v620
    %v634 = vunpack.c.l.b16 %v621
    %v635 = vunpack.c.l.b16 %v622
    %v636 = vunpack.c.l.b16 %v623
    %v637 = vpack.c.b16 %v634, %v633
    %v638 = vpack.c.b16 %v636, %v635
    %v642 = vsel %vm38, %v619, 0
    %644 = vmatprep.subr.bf16.mxu0 0
    %645 = vmatpush1.bf16.msra.mxu0 0
    %646 = vmatprep.subr.bf16.mxu0 0
    %647 = vmatpush1.bf16.msra.mxu0 0
    %648 = vmatprep.subr.bf16.mxu0 0
    %649 = vmatpush1.bf16.msra.mxu0 0
    %650 = vmatprep.subr.bf16.mxu0 0
    %651 = vmatpush1.bf16.msra.mxu0 0
    %652 = vmatprep.subr.bf16.mxu0 0
    %653 = vmatpush1.bf16.msra.mxu0 0
    %654 = vmatprep.subr.bf16.mxu0 0
    %655 = vmatpush1.bf16.msra.mxu0 0
    %656 = vmatprep.subr.bf16.mxu0 0
    %657 = vmatpush1.bf16.msra.mxu0 %v638
    %658 = vmatprep.subr.bf16.mxu0 0
    %659 = vmatpush1.bf16.msra.mxu0 %v637
    %660 = vmatprep.subr.bf16.mxu0 0
    %661 = vmatpush2.bf16.msra.mxu0 0
    %662 = vmatprep.subr.bf16.mxu0 0
    %663 = vmatpush2.bf16.msra.mxu0 0
    %664 = vmatprep.subr.bf16.mxu0 0
    %665 = vmatpush2.bf16.msra.mxu0 0
    %666 = vmatprep.subr.bf16.mxu0 0
    %667 = vmatpush2.bf16.msra.mxu0 0
    %668 = vmatprep.subr.bf16.mxu0 0
    %669 = vmatpush2.bf16.msra.mxu0 0
    %670 = vmatprep.subr.bf16.mxu0 0
    %671 = vmatpush2.bf16.msra.mxu0 0
    %672 = vmatprep.subr.bf16.mxu0 0
    %673 = vmatpush2.bf16.msra.mxu0 0
    %674 = vmatprep.subr.bf16.mxu0 0
    %675 = vmatpush2.bf16.msra.mxu0 0
    %676 = vmatprep.mubr.bf16.mxu0 0
    %677 = vmatmul.mubr.bf16.gmra.mxu0 %v642
    %v678 = vpop.f32.mrf.mxu0
    %v679 = vadd.f32 %v628, %v678
    %v680 = vpop.f32.mrf.mxu0
    %v681 = vpop.f32.mrf.mxu0
    %v682 = vadd.f32 %v628, %v681
    %v683 = vpop.f32.mrf.mxu0
    %684 = vdwg.mxu0
    %v685 = vadd.f32 %v76, %v679
    %v686 = vadd.f32 %v77, %v682
    %v687 = vld [vmem:[%s2 + $0x6] sm:$0x1]
    %v688 = vld [vmem:[%s2 + $0x7] sm:$0x1]
    %v689 = vsel %vm38, %v685, 0.0
    %690 = vadd.xlane.f32.xlu0 %v689
    %v691 = vpop.xlane.xlu0 %690
    %v692 = vsel %vm38, %v686, 0.0
    %693 = vadd.xlane.f32.xlu0 %v692
    %v694 = vpop.xlane.xlu0 %693
    %v695 = vmul.f32 %v691, %v45
    %v696 = vmul.f32 %v694, %v45
    %v697 = vsub.f32 %v685, %v695
    %v698 = vsub.f32 %v686, %v696
    %v699 = vmul.f32 %v697, %v697
    %v700 = vmul.f32 %v698, %v698
    %v701 = vsel %vm38, %v699, 0.0
    %702 = vadd.xlane.f32.xlu0 %v701
    %v703 = vpop.xlane.xlu0 %702
    %v704 = vsel %vm38, %v700, 0.0
    %705 = vadd.xlane.f32.xlu0 %v704
    %v706 = vpop.xlane.xlu0 %705
    %v707 = vmul.f32 %v703, %v45
    %v708 = vmul.f32 %v706, %v45
    %v709 = vadd.f32 %v707, 1e-12
    %v710 = vadd.f32 %v708, 1e-12
    %v711 = vrsqrt.pop %v709
    %v712 = vrsqrt.pop %v710
    %v713 = vmul.f32 %v697, %v711
    %v714 = vmul.f32 %v698, %v712
    %v715 = vlaneseq
    %v716 = vshrl.u32 %v715, 7
    %v717 = vsub.s32 0, %v716
    %v718 = vrot.slane %v687, %v717
    %v719 = vmul.f32 %v713, %v718
    %v720 = vmul.f32 %v714, %v718
    %v721 = vlaneseq
    %v722 = vshrl.u32 %v721, 7
    %v723 = vsub.s32 0, %v722
    %v724 = vrot.slane %v688, %v723
    %v725 = vadd.f32 %v719, %v724
    %v726 = vadd.f32 %v720, %v724
    %v727 = vpack.c.bf16 %v726, %v725
    %v728 = vld [vmem:[%s5] sm:$0xf]
    %v729 = vld [vmem:[%s5 + $0x4] sm:$0xf]
    %v730 = vld [vmem:[%s5 + $0x8] sm:$0xf]
    %v731 = vld [vmem:[%s5 + $0xc] sm:$0xf]
    %v732 = vld [vmem:[%s2 + $0x8] sm:$0x1]
    %v733 = vlaneseq
    %v734 = vshrl.u32 %v733, 7
    %v735 = vsub.s32 0, %v734
    %v736 = vrot.slane %v732, %v735
    %v741 = vunpack.c.l.b16 %v728
    %v742 = vunpack.c.l.b16 %v729
    %v743 = vunpack.c.l.b16 %v730
    %v744 = vunpack.c.l.b16 %v731
    %v745 = vpack.c.b16 %v742, %v741
    %v746 = vpack.c.b16 %v744, %v743
    %v750 = vsel %vm38, %v727, 0
    %752 = vmatprep.subr.bf16.mxu0 0
    %753 = vmatpush1.bf16.msra.mxu0 0
    %754 = vmatprep.subr.bf16.mxu0 0
    %755 = vmatpush1.bf16.msra.mxu0 0
    %756 = vmatprep.subr.bf16.mxu0 0
    %757 = vmatpush1.bf16.msra.mxu0 0
    %758 = vmatprep.subr.bf16.mxu0 0
    %759 = vmatpush1.bf16.msra.mxu0 0
    %760 = vmatprep.subr.bf16.mxu0 0
    %761 = vmatpush1.bf16.msra.mxu0 0
    %762 = vmatprep.subr.bf16.mxu0 0
    %763 = vmatpush1.bf16.msra.mxu0 0
    %764 = vmatprep.subr.bf16.mxu0 0
    %765 = vmatpush1.bf16.msra.mxu0 %v746
    %766 = vmatprep.subr.bf16.mxu0 0
    %767 = vmatpush1.bf16.msra.mxu0 %v745
    %768 = vmatprep.subr.bf16.mxu0 0
    %769 = vmatpush2.bf16.msra.mxu0 0
    %770 = vmatprep.subr.bf16.mxu0 0
    %771 = vmatpush2.bf16.msra.mxu0 0
    %772 = vmatprep.subr.bf16.mxu0 0
    %773 = vmatpush2.bf16.msra.mxu0 0
    %774 = vmatprep.subr.bf16.mxu0 0
    %775 = vmatpush2.bf16.msra.mxu0 0
    %776 = vmatprep.subr.bf16.mxu0 0
    %777 = vmatpush2.bf16.msra.mxu0 0
    %778 = vmatprep.subr.bf16.mxu0 0
    %779 = vmatpush2.bf16.msra.mxu0 0
    %780 = vmatprep.subr.bf16.mxu0 0
    %781 = vmatpush2.bf16.msra.mxu0 0
    %782 = vmatprep.subr.bf16.mxu0 0
    %783 = vmatpush2.bf16.msra.mxu0 0
    %784 = vmatprep.mubr.bf16.mxu0 0
    %785 = vmatmul.mubr.bf16.gmra.mxu0 %v750
    %v786 = vpop.f32.mrf.mxu0
    %v787 = vadd.f32 %v736, %v786
    %v788 = vpop.f32.mrf.mxu0
    %v789 = vpop.f32.mrf.mxu0
    %v790 = vadd.f32 %v736, %v789
    %v791 = vpop.f32.mrf.mxu0
    %792 = vdwg.mxu0
    %v793 = vmul.f32 %v787, 0.5
    %v794 = vmul.f32 %v790, 0.5
    %v795 = vmul.f32 %v787, 0.044715
    %v796 = vmul.f32 %v790, 0.044715
    %v797 = vmul.f32 %v795, %v787
    %v798 = vmul.f32 %v796, %v790
    %v799 = vmul.f32 %v797, %v787
    %v800 = vmul.f32 %v798, %v790
    %v801 = vadd.f32 %v787, %v799
    %v802 = vadd.f32 %v790, %v800
    %v803 = vmul.f32 %v801, 0.7978846
    %v804 = vmul.f32 %v802, 0.7978846
    %v805 = vtanh.pop %v803
    %v806 = vtanh.pop %v804
    %v807 = vadd.f32 %v805, 1.0
    %v808 = vadd.f32 %v806, 1.0
    %v809 = vmul.f32 %v793, %v807
    %v810 = vmul.f32 %v794, %v808
    %v811 = vpack.c.bf16 %v810, %v809
    %v812 = vld [vmem:[%s6] sm:$0xf]
    %v813 = vld [vmem:[%s6 + $0x4] sm:$0xf]
    %v814 = vld [vmem:[%s6 + $0x8] sm:$0xf]
    %v815 = vld [vmem:[%s6 + $0xc] sm:$0xf]
    %v816 = vld [vmem:[%s6 + $0x10] sm:$0xf]
    %v817 = vld [vmem:[%s6 + $0x14] sm:$0xf]
    %v818 = vld [vmem:[%s6 + $0x18] sm:$0xf]
    %v819 = vld [vmem:[%s6 + $0x1c] sm:$0xf]
    %v820 = vld [vmem:[%s6 + $0x20] sm:$0xf]
    %v821 = vld [vmem:[%s6 + $0x24] sm:$0xf]
    %v822 = vld [vmem:[%s6 + $0x28] sm:$0xf]
    %v823 = vld [vmem:[%s6 + $0x2c] sm:$0xf]
    %v824 = vld [vmem:[%s6 + $0x30] sm:$0xf]
    %v825 = vld [vmem:[%s6 + $0x34] sm:$0xf]
    %v826 = vld [vmem:[%s6 + $0x38] sm:$0xf]
    %v827 = vld [vmem:[%s6 + $0x3c] sm:$0xf]
    %v828 = vld [vmem:[%s2 + $0x9] sm:$0x1]
    %v829 = vlaneseq
    %v830 = vshrl.u32 %v829, 7
    %v831 = vsub.s32 0, %v830
    %v832 = vrot.slane %v828, %v831
    %v849 = vunpack.c.l.b16 %v812
    %v850 = vunpack.c.l.b16 %v813
    %v851 = vunpack.c.l.b16 %v814
    %v852 = vunpack.c.l.b16 %v815
    %v853 = vunpack.c.l.b16 %v816
    %v854 = vunpack.c.l.b16 %v817
    %v855 = vunpack.c.l.b16 %v818
    %v856 = vunpack.c.l.b16 %v819
    %v857 = vunpack.c.l.b16 %v820
    %v858 = vunpack.c.l.b16 %v821
    %v859 = vunpack.c.l.b16 %v822
    %v860 = vunpack.c.l.b16 %v823
    %v861 = vunpack.c.l.b16 %v824
    %v862 = vunpack.c.l.b16 %v825
    %v863 = vunpack.c.l.b16 %v826
    %v864 = vunpack.c.l.b16 %v827
    %v865 = vpack.c.b16 %v850, %v849
    %v866 = vpack.c.b16 %v852, %v851
    %v867 = vpack.c.b16 %v854, %v853
    %v868 = vpack.c.b16 %v856, %v855
    %v869 = vpack.c.b16 %v858, %v857
    %v870 = vpack.c.b16 %v860, %v859
    %v871 = vpack.c.b16 %v862, %v861
    %v872 = vpack.c.b16 %v864, %v863
    %881 = vmatprep.subr.bf16.mxu0 0
    %882 = vmatpush1.bf16.msra.mxu0 %v872
    %883 = vmatprep.subr.bf16.mxu0 0
    %884 = vmatpush1.bf16.msra.mxu0 %v871
    %885 = vmatprep.subr.bf16.mxu0 0
    %886 = vmatpush1.bf16.msra.mxu0 %v870
    %887 = vmatprep.subr.bf16.mxu0 0
    %888 = vmatpush1.bf16.msra.mxu0 %v869
    %889 = vmatprep.subr.bf16.mxu0 0
    %890 = vmatpush1.bf16.msra.mxu0 %v868
    %891 = vmatprep.subr.bf16.mxu0 0
    %892 = vmatpush1.bf16.msra.mxu0 %v867
    %893 = vmatprep.subr.bf16.mxu0 0
    %894 = vmatpush1.bf16.msra.mxu0 %v866
    %895 = vmatprep.subr.bf16.mxu0 0
    %896 = vmatpush1.bf16.msra.mxu0 %v865
    %897 = vmatprep.subr.bf16.mxu0 0
    %898 = vmatpush2.bf16.msra.mxu0 0
    %899 = vmatprep.subr.bf16.mxu0 0
    %900 = vmatpush2.bf16.msra.mxu0 0
    %901 = vmatprep.subr.bf16.mxu0 0
    %902 = vmatpush2.bf16.msra.mxu0 0
    %903 = vmatprep.subr.bf16.mxu0 0
    %904 = vmatpush2.bf16.msra.mxu0 0
    %905 = vmatprep.subr.bf16.mxu0 0
    %906 = vmatpush2.bf16.msra.mxu0 0
    %907 = vmatprep.subr.bf16.mxu0 0
    %908 = vmatpush2.bf16.msra.mxu0 0
    %909 = vmatprep.subr.bf16.mxu0 0
    %910 = vmatpush2.bf16.msra.mxu0 0
    %911 = vmatprep.subr.bf16.mxu0 0
    %912 = vmatpush2.bf16.msra.mxu0 0
    %913 = vmatprep.mubr.bf16.mxu0 0
    %914 = vmatmul.mubr.bf16.gmra.mxu0 %v811
    %v915 = vpop.f32.mrf.mxu0
    %v916 = vadd.f32 %v832, %v915
    %v917 = vpop.f32.mrf.mxu0
    %v918 = vpop.f32.mrf.mxu0
    %v919 = vadd.f32 %v832, %v918
    %v920 = vpop.f32.mrf.mxu0
    %921 = vdwg.mxu0
    %v922 = vadd.f32 %v725, %v916
    %v923 = vadd.f32 %v726, %v919
    %v924 = vld [vmem:[%s2 + $0xa] sm:$0x1]
    %v925 = vld [vmem:[%s2 + $0xb] sm:$0x1]
    %v926 = vsel %vm38, %v922, 0.0
    %927 = vadd.xlane.f32.xlu0 %v926
    %v928 = vpop.xlane.xlu0 %927
    %v929 = vsel %vm38, %v923, 0.0
    %930 = vadd.xlane.f32.xlu0 %v929
    %v931 = vpop.xlane.xlu0 %930
    %v932 = vmul.f32 %v928, %v45
    %v933 = vmul.f32 %v931, %v45
    %v934 = vsub.f32 %v922, %v932
    %v935 = vsub.f32 %v923, %v933
    %v936 = vmul.f32 %v934, %v934
    %v937 = vmul.f32 %v935, %v935
    %v938 = vsel %vm38, %v936, 0.0
    %939 = vadd.xlane.f32.xlu0 %v938
    %v940 = vpop.xlane.xlu0 %939
    %v941 = vsel %vm38, %v937, 0.0
    %942 = vadd.xlane.f32.xlu0 %v941
    %v943 = vpop.xlane.xlu0 %942
    %v944 = vmul.f32 %v940, %v45
    %v945 = vmul.f32 %v943, %v45
    %v946 = vadd.f32 %v944, 1e-12
    %v947 = vadd.f32 %v945, 1e-12
    %v948 = vrsqrt.pop %v946
    %v949 = vrsqrt.pop %v947
    %v950 = vmul.f32 %v934, %v948
    %v951 = vmul.f32 %v935, %v949
    %v952 = vlaneseq
    %v953 = vshrl.u32 %v952, 7
    %v954 = vsub.s32 0, %v953
    %v955 = vrot.slane %v924, %v954
    %v956 = vmul.f32 %v950, %v955
    %v957 = vmul.f32 %v951, %v955
    %v958 = vlaneseq
    %v959 = vshrl.u32 %v958, 7
    %v960 = vsub.s32 0, %v959
    %v961 = vrot.slane %v925, %v960
    %v962 = vadd.f32 %v956, %v961
    %v963 = vadd.f32 %v957, %v961
    %v964 = vpack.c.bf16 %v963, %v962
    %s965 = scalar_lea.vmem %s3, 16
    %v966 = vld [vmem:[%s965] sm:$0xf]
    %v967 = vld [vmem:[%s965 + $0x4] sm:$0xf]
    %v968 = vld [vmem:[%s965 + $0x8] sm:$0xf]
    %v969 = vld [vmem:[%s965 + $0xc] sm:$0xf]
    %v970 = vld [vmem:[%s2 + $0xc] sm:$0x1]
    %v971 = vlaneseq
    %v972 = vshrl.u32 %v971, 7
    %v973 = vsub.s32 0, %v972
    %v974 = vrot.slane %v970, %v973
    %v979 = vunpack.c.l.b16 %v966
    %v980 = vunpack.c.l.b16 %v967
    %v981 = vunpack.c.l.b16 %v968
    %v982 = vunpack.c.l.b16 %v969
    %v983 = vpack.c.b16 %v980, %v979
    %v984 = vpack.c.b16 %v982, %v981
    %v988 = vsel %vm38, %v964, 0
    %990 = vmatprep.subr.bf16.mxu0 0
    %991 = vmatpush1.bf16.msra.mxu0 0
    %992 = vmatprep.subr.bf16.mxu0 0
    %993 = vmatpush1.bf16.msra.mxu0 0
    %994 = vmatprep.subr.bf16.mxu0 0
    %995 = vmatpush1.bf16.msra.mxu0 0
    %996 = vmatprep.subr.bf16.mxu0 0
    %997 = vmatpush1.bf16.msra.mxu0 0
    %998 = vmatprep.subr.bf16.mxu0 0
    %999 = vmatpush1.bf16.msra.mxu0 0
    %1000 = vmatprep.subr.bf16.mxu0 0
    %1001 = vmatpush1.bf16.msra.mxu0 0
    %1002 = vmatprep.subr.bf16.mxu0 0
    %1003 = vmatpush1.bf16.msra.mxu0 %v984
    %1004 = vmatprep.subr.bf16.mxu0 0
    %1005 = vmatpush1.bf16.msra.mxu0 %v983
    %1006 = vmatprep.subr.bf16.mxu0 0
    %1007 = vmatpush2.bf16.msra.mxu0 0
    %1008 = vmatprep.subr.bf16.mxu0 0
    %1009 = vmatpush2.bf16.msra.mxu0 0
    %1010 = vmatprep.subr.bf16.mxu0 0
    %1011 = vmatpush2.bf16.msra.mxu0 0
    %1012 = vmatprep.subr.bf16.mxu0 0
    %1013 = vmatpush2.bf16.msra.mxu0 0
    %1014 = vmatprep.subr.bf16.mxu0 0
    %1015 = vmatpush2.bf16.msra.mxu0 0
    %1016 = vmatprep.subr.bf16.mxu0 0
    %1017 = vmatpush2.bf16.msra.mxu0 0
    %1018 = vmatprep.subr.bf16.mxu0 0
    %1019 = vmatpush2.bf16.msra.mxu0 0
    %1020 = vmatprep.subr.bf16.mxu0 0
    %1021 = vmatpush2.bf16.msra.mxu0 0
    %1022 = vmatprep.mubr.bf16.mxu0 0
    %1023 = vmatmul.mubr.bf16.gmra.mxu0 %v988
    %v1024 = vpop.f32.mrf.mxu0
    %v1025 = vadd.f32 %v974, %v1024
    %v1026 = vpop.f32.mrf.mxu0
    %v1027 = vpop.f32.mrf.mxu0
    %v1028 = vadd.f32 %v974, %v1027
    %v1029 = vpop.f32.mrf.mxu0
    %1030 = vdwg.mxu0
    %v1031 = vpack.c.bf16 %v1025, %v1025
    %v1032 = vpack.c.bf16 %v1028, %v1028
    %1034 = vrot.lane.b32.xlu0 %v1031, 96
    %v1035 = vpop.permute.xlu0 %1034
    %v1037 = vsel %vm151, %v1031, 0
    %v1040 = vsel %vm151, %v1035, 0
    %1042 = vmatprep.subr.bf16.mxu0 0
    %1043 = vmatpush1.bf16.xpose.msra.mxu0 0
    %1044 = vmatprep.subr.bf16.mxu0 0
    %1045 = vmatpush1.bf16.xpose.msra.mxu0 0
    %1046 = vmatprep.subr.bf16.mxu0 0
    %1047 = vmatpush1.bf16.xpose.msra.mxu0 0
    %1048 = vmatprep.subr.bf16.mxu0 0
    %1049 = vmatpush1.bf16.xpose.msra.mxu0 0
    %1050 = vmatprep.subr.bf16.mxu0 0
    %1051 = vmatpush1.bf16.xpose.msra.mxu0 0
    %1052 = vmatprep.subr.bf16.mxu0 0
    %1053 = vmatpush1.bf16.xpose.msra.mxu0 0
    %1054 = vmatprep.subr.bf16.mxu0 0
    %1055 = vmatpush1.bf16.xpose.msra.mxu0 0
    %1056 = vmatprep.subr.bf16.mxu0 0
    %1057 = vmatpush1.bf16.xpose.msra.mxu0 %v1040
    %1058 = vmatprep.subr.bf16.mxu0 0
    %1059 = vmatpush2.bf16.xpose.msra.mxu0 0
    %1060 = vmatprep.subr.bf16.mxu0 0
    %1061 = vmatpush2.bf16.xpose.msra.mxu0 0
    %1062 = vmatprep.subr.bf16.mxu0 0
    %1063 = vmatpush2.bf16.xpose.msra.mxu0 0
    %1064 = vmatprep.subr.bf16.mxu0 0
    %1065 = vmatpush2.bf16.xpose.msra.mxu0 0
    %1066 = vmatprep.subr.bf16.mxu0 0
    %1067 = vmatpush2.bf16.xpose.msra.mxu0 0
    %1068 = vmatprep.subr.bf16.mxu0 0
    %1069 = vmatpush2.bf16.xpose.msra.mxu0 0
    %1070 = vmatprep.subr.bf16.mxu0 0
    %1071 = vmatpush2.bf16.xpose.msra.mxu0 0
    %1072 = vmatprep.subr.bf16.mxu0 0
    %1073 = vmatpush2.bf16.xpose.msra.mxu0 0
    %1074 = vmatprep.mubr.bf16.mxu0 0
    %1075 = vmatmul.mubr.bf16.gmra.mxu0 %v1037
    %v1076 = vpop.f32.mrf.mxu0
    %v1077 = vadd.f32 0.0, %v1076
    %v1078 = vpop.f32.mrf.mxu0
    %v1079 = vpop.f32.mrf.mxu0
    %v1080 = vpop.f32.mrf.mxu0
    %1081 = vdwg.mxu0
    %1083 = vrot.lane.b32.xlu0 %v1032, 96
    %v1084 = vpop.permute.xlu0 %1083
    %v1086 = vsel %vm151, %v1032, 0
    %v1089 = vsel %vm151, %v1084, 0
    %1091 = vmatprep.subr.bf16.mxu0 0
    %1092 = vmatpush1.bf16.xpose.msra.mxu0 0
    %1093 = vmatprep.subr.bf16.mxu0 0
    %1094 = vmatpush1.bf16.xpose.msra.mxu0 0
    %1095 = vmatprep.subr.bf16.mxu0 0
    %1096 = vmatpush1.bf16.xpose.msra.mxu0 0
    %1097 = vmatprep.subr.bf16.mxu0 0
    %1098 = vmatpush1.bf16.xpose.msra.mxu0 0
    %1099 = vmatprep.subr.bf16.mxu0 0
    %1100 = vmatpush1.bf16.xpose.msra.mxu0 0
    %1101 = vmatprep.subr.bf16.mxu0 0
    %1102 = vmatpush1.bf16.xpose.msra.mxu0 0
    %1103 = vmatprep.subr.bf16.mxu0 0
    %1104 = vmatpush1.bf16.xpose.msra.mxu0 0
    %1105 = vmatprep.subr.bf16.mxu0 0
    %1106 = vmatpush1.bf16.xpose.msra.mxu0 %v1089
    %1107 = vmatprep.subr.bf16.mxu0 0
    %1108 = vmatpush2.bf16.xpose.msra.mxu0 0
    %1109 = vmatprep.subr.bf16.mxu0 0
    %1110 = vmatpush2.bf16.xpose.msra.mxu0 0
    %1111 = vmatprep.subr.bf16.mxu0 0
    %1112 = vmatpush2.bf16.xpose.msra.mxu0 0
    %1113 = vmatprep.subr.bf16.mxu0 0
    %1114 = vmatpush2.bf16.xpose.msra.mxu0 0
    %1115 = vmatprep.subr.bf16.mxu0 0
    %1116 = vmatpush2.bf16.xpose.msra.mxu0 0
    %1117 = vmatprep.subr.bf16.mxu0 0
    %1118 = vmatpush2.bf16.xpose.msra.mxu0 0
    %1119 = vmatprep.subr.bf16.mxu0 0
    %1120 = vmatpush2.bf16.xpose.msra.mxu0 0
    %1121 = vmatprep.subr.bf16.mxu0 0
    %1122 = vmatpush2.bf16.xpose.msra.mxu0 0
    %1123 = vmatprep.mubr.bf16.mxu0 0
    %1124 = vmatmul.mubr.bf16.gmra.mxu0 %v1086
    %v1125 = vpop.f32.mrf.mxu0
    %v1126 = vadd.f32 0.0, %v1125
    %v1127 = vpop.f32.mrf.mxu0
    %v1128 = vpop.f32.mrf.mxu0
    %v1129 = vpop.f32.mrf.mxu0
    %1130 = vdwg.mxu0
    %v1131 = vmul.f32 %v1077, 0.25
    %v1132 = vmul.f32 %v1126, 0.25
    %v1133 = vadd.f32 %v1131, %v254
    %v1134 = vadd.f32 %v1132, %v258
    %v1135 = vsel %vm263, %v1133, -inf
    %1136 = vmax.xlane.f32.xlu0 %v1135
    %v1137 = vpop.xlane.xlu0 %1136
    %v1138 = vsel %vm263, %v1134, -inf
    %1139 = vmax.xlane.f32.xlu0 %v1138
    %v1140 = vpop.xlane.xlu0 %1139
    %v1141 = vsub.f32 %v1133, %v1137
    %v1142 = vsub.f32 %v1134, %v1140
    %v1143 = vmul.f32 %v1141, 1.442695
    %v1144 = vpow.pop %v1143
    %v1145 = vmul.f32 %v1142, 1.442695
    %v1146 = vpow.pop %v1145
    %v1147 = vsel %vm263, %v1144, 0.0
    %1148 = vadd.xlane.f32.xlu0 %v1147
    %v1149 = vpop.xlane.xlu0 %1148
    %v1150 = vsel %vm263, %v1146, 0.0
    %1151 = vadd.xlane.f32.xlu0 %v1150
    %v1152 = vpop.xlane.xlu0 %1151
    %v1153 = vrcp.pop %v1149
    %v1154 = vrcp.pop %v1152
    %v1155 = vmul.f32 %v1144, %v1153
    %v1156 = vmul.f32 %v1146, %v1154
    %v1157 = vpack.c.bf16 %v1155, %v1155
    %v1158 = vpack.c.bf16 %v1156, %v1156
    %1159 = vrot.lane.b32.xlu0 %v1031, 64
    %v1160 = vpop.permute.xlu0 %1159
    %v1162 = vsel %vm263, %v1157, 0
    %v1165 = vsel %vm293, %v1160, 0
    %1167 = vmatprep.subr.bf16.mxu0 0
    %1168 = vmatpush1.bf16.msra.mxu0 0
    %1169 = vmatprep.subr.bf16.mxu0 0
    %1170 = vmatpush1.bf16.msra.mxu0 0
    %1171 = vmatprep.subr.bf16.mxu0 0
    %1172 = vmatpush1.bf16.msra.mxu0 0
    %1173 = vmatprep.subr.bf16.mxu0 0
    %1174 = vmatpush1.bf16.msra.mxu0 0
    %1175 = vmatprep.subr.bf16.mxu0 0
    %1176 = vmatpush1.bf16.msra.mxu0 0
    %1177 = vmatprep.subr.bf16.mxu0 0
    %1178 = vmatpush1.bf16.msra.mxu0 0
    %1179 = vmatprep.subr.bf16.mxu0 0
    %1180 = vmatpush1.bf16.msra.mxu0 0
    %1181 = vmatprep.subr.bf16.mxu0 0
    %1182 = vmatpush1.bf16.msra.mxu0 %v1165
    %1183 = vmatprep.subr.bf16.mxu0 0
    %1184 = vmatpush2.bf16.msra.mxu0 0
    %1185 = vmatprep.subr.bf16.mxu0 0
    %1186 = vmatpush2.bf16.msra.mxu0 0
    %1187 = vmatprep.subr.bf16.mxu0 0
    %1188 = vmatpush2.bf16.msra.mxu0 0
    %1189 = vmatprep.subr.bf16.mxu0 0
    %1190 = vmatpush2.bf16.msra.mxu0 0
    %1191 = vmatprep.subr.bf16.mxu0 0
    %1192 = vmatpush2.bf16.msra.mxu0 0
    %1193 = vmatprep.subr.bf16.mxu0 0
    %1194 = vmatpush2.bf16.msra.mxu0 0
    %1195 = vmatprep.subr.bf16.mxu0 0
    %1196 = vmatpush2.bf16.msra.mxu0 0
    %1197 = vmatprep.subr.bf16.mxu0 0
    %1198 = vmatpush2.bf16.msra.mxu0 0
    %1199 = vmatprep.mubr.bf16.mxu0 0
    %1200 = vmatmul.mubr.bf16.gmra.mxu0 %v1162
    %v1201 = vpop.f32.mrf.mxu0
    %v1202 = vadd.f32 0.0, %v1201
    %v1203 = vpop.f32.mrf.mxu0
    %v1204 = vpop.f32.mrf.mxu0
    %v1205 = vpop.f32.mrf.mxu0
    %1206 = vdwg.mxu0
    %1207 = vrot.lane.b32.xlu0 %v1032, 64
    %v1208 = vpop.permute.xlu0 %1207
    %v1210 = vsel %vm263, %v1158, 0
    %v1213 = vsel %vm293, %v1208, 0
    %1215 = vmatprep.subr.bf16.mxu0 0
    %1216 = vmatpush1.bf16.msra.mxu0 0
    %1217 = vmatprep.subr.bf16.mxu0 0
    %1218 = vmatpush1.bf16.msra.mxu0 0
    %1219 = vmatprep.subr.bf16.mxu0 0
    %1220 = vmatpush1.bf16.msra.mxu0 0
    %1221 = vmatprep.subr.bf16.mxu0 0
    %1222 = vmatpush1.bf16.msra.mxu0 0
    %1223 = vmatprep.subr.bf16.mxu0 0
    %1224 = vmatpush1.bf16.msra.mxu0 0
    %1225 = vmatprep.subr.bf16.mxu0 0
    %1226 = vmatpush1.bf16.msra.mxu0 0
    %1227 = vmatprep.subr.bf16.mxu0 0
    %1228 = vmatpush1.bf16.msra.mxu0 0
    %1229 = vmatprep.subr.bf16.mxu0 0
    %1230 = vmatpush1.bf16.msra.mxu0 %v1213
    %1231 = vmatprep.subr.bf16.mxu0 0
    %1232 = vmatpush2.bf16.msra.mxu0 0
    %1233 = vmatprep.subr.bf16.mxu0 0
    %1234 = vmatpush2.bf16.msra.mxu0 0
    %1235 = vmatprep.subr.bf16.mxu0 0
    %1236 = vmatpush2.bf16.msra.mxu0 0
    %1237 = vmatprep.subr.bf16.mxu0 0
    %1238 = vmatpush2.bf16.msra.mxu0 0
    %1239 = vmatprep.subr.bf16.mxu0 0
    %1240 = vmatpush2.bf16.msra.mxu0 0
    %1241 = vmatprep.subr.bf16.mxu0 0
    %1242 = vmatpush2.bf16.msra.mxu0 0
    %1243 = vmatprep.subr.bf16.mxu0 0
    %1244 = vmatpush2.bf16.msra.mxu0 0
    %1245 = vmatprep.subr.bf16.mxu0 0
    %1246 = vmatpush2.bf16.msra.mxu0 0
    %1247 = vmatprep.mubr.bf16.mxu0 0
    %1248 = vmatmul.mubr.bf16.gmra.mxu0 %v1210
    %v1249 = vpop.f32.mrf.mxu0
    %v1250 = vadd.f32 0.0, %v1249
    %v1251 = vpop.f32.mrf.mxu0
    %v1252 = vpop.f32.mrf.mxu0
    %v1253 = vpop.f32.mrf.mxu0
    %1254 = vdwg.mxu0
    %1255 = vrot.lane.b32.xlu0 %v1031, 112
    %v1256 = vpop.permute.xlu0 %1255
    %1257 = vrot.lane.b32.xlu0 %v1031, 80
    %v1258 = vpop.permute.xlu0 %1257
    %v1260 = vsel %vm151, %v1256, 0
    %v1263 = vsel %vm151, %v1258, 0
    %1265 = vmatprep.subr.bf16.mxu0 0
    %1266 = vmatpush1.bf16.xpose.msra.mxu0 0
    %1267 = vmatprep.subr.bf16.mxu0 0
    %1268 = vmatpush1.bf16.xpose.msra.mxu0 0
    %1269 = vmatprep.subr.bf16.mxu0 0
    %1270 = vmatpush1.bf16.xpose.msra.mxu0 0
    %1271 = vmatprep.subr.bf16.mxu0 0
    %1272 = vmatpush1.bf16.xpose.msra.mxu0 0
    %1273 = vmatprep.subr.bf16.mxu0 0
    %1274 = vmatpush1.bf16.xpose.msra.mxu0 0
    %1275 = vmatprep.subr.bf16.mxu0 0
    %1276 = vmatpush1.bf16.xpose.msra.mxu0 0
    %1277 = vmatprep.subr.bf16.mxu0 0
    %1278 = vmatpush1.bf16.xpose.msra.mxu0 0
    %1279 = vmatprep.subr.bf16.mxu0 0
    %1280 = vmatpush1.bf16.xpose.msra.mxu0 %v1263
    %1281 = vmatprep.subr.bf16.mxu0 0
    %1282 = vmatpush2.bf16.xpose.msra.mxu0 0
    %1283 = vmatprep.subr.bf16.mxu0 0
    %1284 = vmatpush2.bf16.xpose.msra.mxu0 0
    %1285 = vmatprep.subr.bf16.mxu0 0
    %1286 = vmatpush2.bf16.xpose.msra.mxu0 0
    %1287 = vmatprep.subr.bf16.mxu0 0
    %1288 = vmatpush2.bf16.xpose.msra.mxu0 0
    %1289 = vmatprep.subr.bf16.mxu0 0
    %1290 = vmatpush2.bf16.xpose.msra.mxu0 0
    %1291 = vmatprep.subr.bf16.mxu0 0
    %1292 = vmatpush2.bf16.xpose.msra.mxu0 0
    %1293 = vmatprep.subr.bf16.mxu0 0
    %1294 = vmatpush2.bf16.xpose.msra.mxu0 0
    %1295 = vmatprep.subr.bf16.mxu0 0
    %1296 = vmatpush2.bf16.xpose.msra.mxu0 0
    %1297 = vmatprep.mubr.bf16.mxu0 0
    %1298 = vmatmul.mubr.bf16.gmra.mxu0 %v1260
    %v1299 = vpop.f32.mrf.mxu0
    %v1300 = vadd.f32 0.0, %v1299
    %v1301 = vpop.f32.mrf.mxu0
    %v1302 = vpop.f32.mrf.mxu0
    %v1303 = vpop.f32.mrf.mxu0
    %1304 = vdwg.mxu0
    %1305 = vrot.lane.b32.xlu0 %v1032, 112
    %v1306 = vpop.permute.xlu0 %1305
    %1307 = vrot.lane.b32.xlu0 %v1032, 80
    %v1308 = vpop.permute.xlu0 %1307
    %v1310 = vsel %vm151, %v1306, 0
    %v1313 = vsel %vm151, %v1308, 0
    %1315 = vmatprep.subr.bf16.mxu0 0
    %1316 = vmatpush1.bf16.xpose.msra.mxu0 0
    %1317 = vmatprep.subr.bf16.mxu0 0
    %1318 = vmatpush1.bf16.xpose.msra.mxu0 0
    %1319 = vmatprep.subr.bf16.mxu0 0
    %1320 = vmatpush1.bf16.xpose.msra.mxu0 0
    %1321 = vmatprep.subr.bf16.mxu0 0
    %1322 = vmatpush1.bf16.xpose.msra.mxu0 0
    %1323 = vmatprep.subr.bf16.mxu0 0
    %1324 = vmatpush1.bf16.xpose.msra.mxu0 0
    %1325 = vmatprep.subr.bf16.mxu0 0
    %1326 = vmatpush1.bf16.xpose.msra.mxu0 0
    %1327 = vmatprep.subr.bf16.mxu0 0
    %1328 = vmatpush1.bf16.xpose.msra.mxu0 0
    %1329 = vmatprep.subr.bf16.mxu0 0
    %1330 = vmatpush1.bf16.xpose.msra.mxu0 %v1313
    %1331 = vmatprep.subr.bf16.mxu0 0
    %1332 = vmatpush2.bf16.xpose.msra.mxu0 0
    %1333 = vmatprep.subr.bf16.mxu0 0
    %1334 = vmatpush2.bf16.xpose.msra.mxu0 0
    %1335 = vmatprep.subr.bf16.mxu0 0
    %1336 = vmatpush2.bf16.xpose.msra.mxu0 0
    %1337 = vmatprep.subr.bf16.mxu0 0
    %1338 = vmatpush2.bf16.xpose.msra.mxu0 0
    %1339 = vmatprep.subr.bf16.mxu0 0
    %1340 = vmatpush2.bf16.xpose.msra.mxu0 0
    %1341 = vmatprep.subr.bf16.mxu0 0
    %1342 = vmatpush2.bf16.xpose.msra.mxu0 0
    %1343 = vmatprep.subr.bf16.mxu0 0
    %1344 = vmatpush2.bf16.xpose.msra.mxu0 0
    %1345 = vmatprep.subr.bf16.mxu0 0
    %1346 = vmatpush2.bf16.xpose.msra.mxu0 0
    %1347 = vmatprep.mubr.bf16.mxu0 0
    %1348 = vmatmul.mubr.bf16.gmra.mxu0 %v1310
    %v1349 = vpop.f32.mrf.mxu0
    %v1350 = vadd.f32 0.0, %v1349
    %v1351 = vpop.f32.mrf.mxu0
    %v1352 = vpop.f32.mrf.mxu0
    %v1353 = vpop.f32.mrf.mxu0
    %1354 = vdwg.mxu0
    %v1355 = vmul.f32 %v1300, 0.25
    %v1356 = vmul.f32 %v1350, 0.25
    %v1357 = vadd.f32 %v1355, %v254
    %v1358 = vadd.f32 %v1356, %v258
    %v1359 = vsel %vm263, %v1357, -inf
    %1360 = vmax.xlane.f32.xlu0 %v1359
    %v1361 = vpop.xlane.xlu0 %1360
    %v1362 = vsel %vm263, %v1358, -inf
    %1363 = vmax.xlane.f32.xlu0 %v1362
    %v1364 = vpop.xlane.xlu0 %1363
    %v1365 = vsub.f32 %v1357, %v1361
    %v1366 = vsub.f32 %v1358, %v1364
    %v1367 = vmul.f32 %v1365, 1.442695
    %v1368 = vpow.pop %v1367
    %v1369 = vmul.f32 %v1366, 1.442695
    %v1370 = vpow.pop %v1369
    %v1371 = vsel %vm263, %v1368, 0.0
    %1372 = vadd.xlane.f32.xlu0 %v1371
    %v1373 = vpop.xlane.xlu0 %1372
    %v1374 = vsel %vm263, %v1370, 0.0
    %1375 = vadd.xlane.f32.xlu0 %v1374
    %v1376 = vpop.xlane.xlu0 %1375
    %v1377 = vrcp.pop %v1373
    %v1378 = vrcp.pop %v1376
    %v1379 = vmul.f32 %v1368, %v1377
    %v1380 = vmul.f32 %v1370, %v1378
    %v1381 = vpack.c.bf16 %v1379, %v1379
    %v1382 = vpack.c.bf16 %v1380, %v1380
    %1383 = vrot.lane.b32.xlu0 %v1031, 48
    %v1384 = vpop.permute.xlu0 %1383
    %v1386 = vsel %vm263, %v1381, 0
    %v1389 = vsel %vm293, %v1384, 0
    %1391 = vmatprep.subr.bf16.mxu0 0
    %1392 = vmatpush1.bf16.msra.mxu0 0
    %1393 = vmatprep.subr.bf16.mxu0 0
    %1394 = vmatpush1.bf16.msra.mxu0 0
    %1395 = vmatprep.subr.bf16.mxu0 0
    %1396 = vmatpush1.bf16.msra.mxu0 0
    %1397 = vmatprep.subr.bf16.mxu0 0
    %1398 = vmatpush1.bf16.msra.mxu0 0
    %1399 = vmatprep.subr.bf16.mxu0 0
    %1400 = vmatpush1.bf16.msra.mxu0 0
    %1401 = vmatprep.subr.bf16.mxu0 0
    %1402 = vmatpush1.bf16.msra.mxu0 0
    %1403 = vmatprep.subr.bf16.mxu0 0
    %1404 = vmatpush1.bf16.msra.mxu0 0
    %1405 = vmatprep.subr.bf16.mxu0 0
    %1406 = vmatpush1.bf16.msra.mxu0 %v1389
    %1407 = vmatprep.subr.bf16.mxu0 0
    %1408 = vmatpush2.bf16.msra.mxu0 0
    %1409 = vmatprep.subr.bf16.mxu0 0
    %1410 = vmatpush2.bf16.msra.mxu0 0
    %1411 = vmatprep.subr.bf16.mxu0 0
    %1412 = vmatpush2.bf16.msra.mxu0 0
    %1413 = vmatprep.subr.bf16.mxu0 0
    %1414 = vmatpush2.bf16.msra.mxu0 0
    %1415 = vmatprep.subr.bf16.mxu0 0
    %1416 = vmatpush2.bf16.msra.mxu0 0
    %1417 = vmatprep.subr.bf16.mxu0 0
    %1418 = vmatpush2.bf16.msra.mxu0 0
    %1419 = vmatprep.subr.bf16.mxu0 0
    %1420 = vmatpush2.bf16.msra.mxu0 0
    %1421 = vmatprep.subr.bf16.mxu0 0
    %1422 = vmatpush2.bf16.msra.mxu0 0
    %1423 = vmatprep.mubr.bf16.mxu0 0
    %1424 = vmatmul.mubr.bf16.gmra.mxu0 %v1386
    %v1425 = vpop.f32.mrf.mxu0
    %v1426 = vadd.f32 0.0, %v1425
    %v1427 = vpop.f32.mrf.mxu0
    %v1428 = vpop.f32.mrf.mxu0
    %v1429 = vpop.f32.mrf.mxu0
    %1430 = vdwg.mxu0
    %1431 = vrot.lane.b32.xlu0 %v1032, 48
    %v1432 = vpop.permute.xlu0 %1431
    %v1434 = vsel %vm263, %v1382, 0
    %v1437 = vsel %vm293, %v1432, 0
    %1439 = vmatprep.subr.bf16.mxu0 0
    %1440 = vmatpush1.bf16.msra.mxu0 0
    %1441 = vmatprep.subr.bf16.mxu0 0
    %1442 = vmatpush1.bf16.msra.mxu0 0
    %1443 = vmatprep.subr.bf16.mxu0 0
    %1444 = vmatpush1.bf16.msra.mxu0 0
    %1445 = vmatprep.subr.bf16.mxu0 0
    %1446 = vmatpush1.bf16.msra.mxu0 0
    %1447 = vmatprep.subr.bf16.mxu0 0
    %1448 = vmatpush1.bf16.msra.mxu0 0
    %1449 = vmatprep.subr.bf16.mxu0 0
    %1450 = vmatpush1.bf16.msra.mxu0 0
    %1451 = vmatprep.subr.bf16.mxu0 0
    %1452 = vmatpush1.bf16.msra.mxu0 0
    %1453 = vmatprep.subr.bf16.mxu0 0
    %1454 = vmatpush1.bf16.msra.mxu0 %v1437
    %1455 = vmatprep.subr.bf16.mxu0 0
    %1456 = vmatpush2.bf16.msra.mxu0 0
    %1457 = vmatprep.subr.bf16.mxu0 0
    %1458 = vmatpush2.bf16.msra.mxu0 0
    %1459 = vmatprep.subr.bf16.mxu0 0
    %1460 = vmatpush2.bf16.msra.mxu0 0
    %1461 = vmatprep.subr.bf16.mxu0 0
    %1462 = vmatpush2.bf16.msra.mxu0 0
    %1463 = vmatprep.subr.bf16.mxu0 0
    %1464 = vmatpush2.bf16.msra.mxu0 0
    %1465 = vmatprep.subr.bf16.mxu0 0
    %1466 = vmatpush2.bf16.msra.mxu0 0
    %1467 = vmatprep.subr.bf16.mxu0 0
    %1468 = vmatpush2.bf16.msra.mxu0 0
    %1469 = vmatprep.subr.bf16.mxu0 0
    %1470 = vmatpush2.bf16.msra.mxu0 0
    %1471 = vmatprep.mubr.bf16.mxu0 0
    %1472 = vmatmul.mubr.bf16.gmra.mxu0 %v1434
    %v1473 = vpop.f32.mrf.mxu0
    %v1474 = vadd.f32 0.0, %v1473
    %v1475 = vpop.f32.mrf.mxu0
    %v1476 = vpop.f32.mrf.mxu0
    %v1477 = vpop.f32.mrf.mxu0
    %1478 = vdwg.mxu0
    %1481 = vrot.lane.b32.xlu0 %v1426, 16
    %v1482 = vpop.permute.xlu0 %1481
    %1483 = vrot.lane.b32.xlu0 %v1474, 16
    %v1484 = vpop.permute.xlu0 %1483
    %v1487 = vsel %vm151, %v1202, %v1482
    %v1488 = vsel %vm151, %v1250, %v1484
    %v1489 = vpack.c.bf16 %v1488, %v1487
    %s1490 = scalar_lea.vmem %s4, 16
    %v1491 = vld [vmem:[%s1490] sm:$0xf]
    %v1492 = vld [vmem:[%s1490 + $0x4] sm:$0xf]
    %v1493 = vld [vmem:[%s1490 + $0x8] sm:$0xf]
    %v1494 = vld [vmem:[%s1490 + $0xc] sm:$0xf]
    %v1495 = vld [vmem:[%s2 + $0xd] sm:$0x1]
    %v1496 = vlaneseq
    %v1497 = vshrl.u32 %v1496, 7
    %v1498 = vsub.s32 0, %v1497
    %v1499 = vrot.slane %v1495, %v1498
    %v1504 = vunpack.c.l.b16 %v1491
    %v1505 = vunpack.c.l.b16 %v1492
    %v1506 = vunpack.c.l.b16 %v1493
    %v1507 = vunpack.c.l.b16 %v1494
    %v1508 = vpack.c.b16 %v1505, %v1504
    %v1509 = vpack.c.b16 %v1507, %v1506
    %v1513 = vsel %vm38, %v1489, 0
    %1515 = vmatprep.subr.bf16.mxu0 0
    %1516 = vmatpush1.bf16.msra.mxu0 0
    %1517 = vmatprep.subr.bf16.mxu0 0
    %1518 = vmatpush1.bf16.msra.mxu0 0
    %1519 = vmatprep.subr.bf16.mxu0 0
    %1520 = vmatpush1.bf16.msra.mxu0 0
    %1521 = vmatprep.subr.bf16.mxu0 0
    %1522 = vmatpush1.bf16.msra.mxu0 0
    %1523 = vmatprep.subr.bf16.mxu0 0
    %1524 = vmatpush1.bf16.msra.mxu0 0
    %1525 = vmatprep.subr.bf16.mxu0 0
    %1526 = vmatpush1.bf16.msra.mxu0 0
    %1527 = vmatprep.subr.bf16.mxu0 0
    %1528 = vmatpush1.bf16.msra.mxu0 %v1509
    %1529 = vmatprep.subr.bf16.mxu0 0
    %1530 = vmatpush1.bf16.msra.mxu0 %v1508
    %1531 = vmatprep.subr.bf16.mxu0 0
    %1532 = vmatpush2.bf16.msra.mxu0 0
    %1533 = vmatprep.subr.bf16.mxu0 0
    %1534 = vmatpush2.bf16.msra.mxu0 0
    %1535 = vmatprep.subr.bf16.mxu0 0
    %1536 = vmatpush2.bf16.msra.mxu0 0
    %1537 = vmatprep.subr.bf16.mxu0 0
    %1538 = vmatpush2.bf16.msra.mxu0 0
    %1539 = vmatprep.subr.bf16.mxu0 0
    %1540 = vmatpush2.bf16.msra.mxu0 0
    %1541 = vmatprep.subr.bf16.mxu0 0
    %1542 = vmatpush2.bf16.msra.mxu0 0
    %1543 = vmatprep.subr.bf16.mxu0 0
    %1544 = vmatpush2.bf16.msra.mxu0 0
    %1545 = vmatprep.subr.bf16.mxu0 0
    %1546 = vmatpush2.bf16.msra.mxu0 0
    %1547 = vmatprep.mubr.bf16.mxu0 0
    %1548 = vmatmul.mubr.bf16.gmra.mxu0 %v1513
    %v1549 = vpop.f32.mrf.mxu0
    %v1550 = vadd.f32 %v1499, %v1549
    %v1551 = vpop.f32.mrf.mxu0
    %v1552 = vpop.f32.mrf.mxu0
    %v1553 = vadd.f32 %v1499, %v1552
    %v1554 = vpop.f32.mrf.mxu0
    %1555 = vdwg.mxu0
    %v1556 = vadd.f32 %v962, %v1550
    %v1557 = vadd.f32 %v963, %v1553
    %v1558 = vld [vmem:[%s2 + $0xe] sm:$0x1]
    %v1559 = vld [vmem:[%s2 + $0xf] sm:$0x1]
    %v1560 = vsel %vm38, %v1556, 0.0
    %1561 = vadd.xlane.f32.xlu0 %v1560
    %v1562 = vpop.xlane.xlu0 %1561
    %v1563 = vsel %vm38, %v1557, 0.0
    %1564 = vadd.xlane.f32.xlu0 %v1563
    %v1565 = vpop.xlane.xlu0 %1564
    %v1566 = vmul.f32 %v1562, %v45
    %v1567 = vmul.f32 %v1565, %v45
    %v1568 = vsub.f32 %v1556, %v1566
    %v1569 = vsub.f32 %v1557, %v1567
    %v1570 = vmul.f32 %v1568, %v1568
    %v1571 = vmul.f32 %v1569, %v1569
    %v1572 = vsel %vm38, %v1570, 0.0
    %1573 = vadd.xlane.f32.xlu0 %v1572
    %v1574 = vpop.xlane.xlu0 %1573
    %v1575 = vsel %vm38, %v1571, 0.0
    %1576 = vadd.xlane.f32.xlu0 %v1575
    %v1577 = vpop.xlane.xlu0 %1576
    %v1578 = vmul.f32 %v1574, %v45
    %v1579 = vmul.f32 %v1577, %v45
    %v1580 = vadd.f32 %v1578, 1e-12
    %v1581 = vadd.f32 %v1579, 1e-12
    %v1582 = vrsqrt.pop %v1580
    %v1583 = vrsqrt.pop %v1581
    %v1584 = vmul.f32 %v1568, %v1582
    %v1585 = vmul.f32 %v1569, %v1583
    %v1586 = vlaneseq
    %v1587 = vshrl.u32 %v1586, 7
    %v1588 = vsub.s32 0, %v1587
    %v1589 = vrot.slane %v1558, %v1588
    %v1590 = vmul.f32 %v1584, %v1589
    %v1591 = vmul.f32 %v1585, %v1589
    %v1592 = vlaneseq
    %v1593 = vshrl.u32 %v1592, 7
    %v1594 = vsub.s32 0, %v1593
    %v1595 = vrot.slane %v1559, %v1594
    %v1596 = vadd.f32 %v1590, %v1595
    %v1597 = vadd.f32 %v1591, %v1595
    %v1598 = vpack.c.bf16 %v1597, %v1596
    %s1599 = scalar_lea.vmem %s5, 16
    %v1600 = vld [vmem:[%s1599] sm:$0xf]
    %v1601 = vld [vmem:[%s1599 + $0x4] sm:$0xf]
    %v1602 = vld [vmem:[%s1599 + $0x8] sm:$0xf]
    %v1603 = vld [vmem:[%s1599 + $0xc] sm:$0xf]
    %v1604 = vld [vmem:[%s2 + $0x10] sm:$0x1]
    %v1605 = vlaneseq
    %v1606 = vshrl.u32 %v1605, 7
    %v1607 = vsub.s32 0, %v1606
    %v1608 = vrot.slane %v1604, %v1607
    %v1613 = vunpack.c.l.b16 %v1600
    %v1614 = vunpack.c.l.b16 %v1601
    %v1615 = vunpack.c.l.b16 %v1602
    %v1616 = vunpack.c.l.b16 %v1603
    %v1617 = vpack.c.b16 %v1614, %v1613
    %v1618 = vpack.c.b16 %v1616, %v1615
    %v1622 = vsel %vm38, %v1598, 0
    %1624 = vmatprep.subr.bf16.mxu0 0
    %1625 = vmatpush1.bf16.msra.mxu0 0
    %1626 = vmatprep.subr.bf16.mxu0 0
    %1627 = vmatpush1.bf16.msra.mxu0 0
    %1628 = vmatprep.subr.bf16.mxu0 0
    %1629 = vmatpush1.bf16.msra.mxu0 0
    %1630 = vmatprep.subr.bf16.mxu0 0
    %1631 = vmatpush1.bf16.msra.mxu0 0
    %1632 = vmatprep.subr.bf16.mxu0 0
    %1633 = vmatpush1.bf16.msra.mxu0 0
    %1634 = vmatprep.subr.bf16.mxu0 0
    %1635 = vmatpush1.bf16.msra.mxu0 0
    %1636 = vmatprep.subr.bf16.mxu0 0
    %1637 = vmatpush1.bf16.msra.mxu0 %v1618
    %1638 = vmatprep.subr.bf16.mxu0 0
    %1639 = vmatpush1.bf16.msra.mxu0 %v1617
    %1640 = vmatprep.subr.bf16.mxu0 0
    %1641 = vmatpush2.bf16.msra.mxu0 0
    %1642 = vmatprep.subr.bf16.mxu0 0
    %1643 = vmatpush2.bf16.msra.mxu0 0
    %1644 = vmatprep.subr.bf16.mxu0 0
    %1645 = vmatpush2.bf16.msra.mxu0 0
    %1646 = vmatprep.subr.bf16.mxu0 0
    %1647 = vmatpush2.bf16.msra.mxu0 0
    %1648 = vmatprep.subr.bf16.mxu0 0
    %1649 = vmatpush2.bf16.msra.mxu0 0
    %1650 = vmatprep.subr.bf16.mxu0 0
    %1651 = vmatpush2.bf16.msra.mxu0 0
    %1652 = vmatprep.subr.bf16.mxu0 0
    %1653 = vmatpush2.bf16.msra.mxu0 0
    %1654 = vmatprep.subr.bf16.mxu0 0
    %1655 = vmatpush2.bf16.msra.mxu0 0
    %1656 = vmatprep.mubr.bf16.mxu0 0
    %1657 = vmatmul.mubr.bf16.gmra.mxu0 %v1622
    %v1658 = vpop.f32.mrf.mxu0
    %v1659 = vadd.f32 %v1608, %v1658
    %v1660 = vpop.f32.mrf.mxu0
    %v1661 = vpop.f32.mrf.mxu0
    %v1662 = vadd.f32 %v1608, %v1661
    %v1663 = vpop.f32.mrf.mxu0
    %1664 = vdwg.mxu0
    %v1665 = vmul.f32 %v1659, 0.5
    %v1666 = vmul.f32 %v1662, 0.5
    %v1667 = vmul.f32 %v1659, 0.044715
    %v1668 = vmul.f32 %v1662, 0.044715
    %v1669 = vmul.f32 %v1667, %v1659
    %v1670 = vmul.f32 %v1668, %v1662
    %v1671 = vmul.f32 %v1669, %v1659
    %v1672 = vmul.f32 %v1670, %v1662
    %v1673 = vadd.f32 %v1659, %v1671
    %v1674 = vadd.f32 %v1662, %v1672
    %v1675 = vmul.f32 %v1673, 0.7978846
    %v1676 = vmul.f32 %v1674, 0.7978846
    %v1677 = vtanh.pop %v1675
    %v1678 = vtanh.pop %v1676
    %v1679 = vadd.f32 %v1677, 1.0
    %v1680 = vadd.f32 %v1678, 1.0
    %v1681 = vmul.f32 %v1665, %v1679
    %v1682 = vmul.f32 %v1666, %v1680
    %v1683 = vpack.c.bf16 %v1682, %v1681
    %s1684 = scalar_lea.vmem %s6, 64
    %v1685 = vld [vmem:[%s1684] sm:$0xf]
    %v1686 = vld [vmem:[%s1684 + $0x4] sm:$0xf]
    %v1687 = vld [vmem:[%s1684 + $0x8] sm:$0xf]
    %v1688 = vld [vmem:[%s1684 + $0xc] sm:$0xf]
    %v1689 = vld [vmem:[%s1684 + $0x10] sm:$0xf]
    %v1690 = vld [vmem:[%s1684 + $0x14] sm:$0xf]
    %v1691 = vld [vmem:[%s1684 + $0x18] sm:$0xf]
    %v1692 = vld [vmem:[%s1684 + $0x1c] sm:$0xf]
    %v1693 = vld [vmem:[%s1684 + $0x20] sm:$0xf]
    %v1694 = vld [vmem:[%s1684 + $0x24] sm:$0xf]
    %v1695 = vld [vmem:[%s1684 + $0x28] sm:$0xf]
    %v1696 = vld [vmem:[%s1684 + $0x2c] sm:$0xf]
    %v1697 = vld [vmem:[%s1684 + $0x30] sm:$0xf]
    %v1698 = vld [vmem:[%s1684 + $0x34] sm:$0xf]
    %v1699 = vld [vmem:[%s1684 + $0x38] sm:$0xf]
    %v1700 = vld [vmem:[%s1684 + $0x3c] sm:$0xf]
    %v1701 = vld [vmem:[%s2 + $0x11] sm:$0x1]
    %v1702 = vlaneseq
    %v1703 = vshrl.u32 %v1702, 7
    %v1704 = vsub.s32 0, %v1703
    %v1705 = vrot.slane %v1701, %v1704
    %v1722 = vunpack.c.l.b16 %v1685
    %v1723 = vunpack.c.l.b16 %v1686
    %v1724 = vunpack.c.l.b16 %v1687
    %v1725 = vunpack.c.l.b16 %v1688
    %v1726 = vunpack.c.l.b16 %v1689
    %v1727 = vunpack.c.l.b16 %v1690
    %v1728 = vunpack.c.l.b16 %v1691
    %v1729 = vunpack.c.l.b16 %v1692
    %v1730 = vunpack.c.l.b16 %v1693
    %v1731 = vunpack.c.l.b16 %v1694
    %v1732 = vunpack.c.l.b16 %v1695
    %v1733 = vunpack.c.l.b16 %v1696
    %v1734 = vunpack.c.l.b16 %v1697
    %v1735 = vunpack.c.l.b16 %v1698
    %v1736 = vunpack.c.l.b16 %v1699
    %v1737 = vunpack.c.l.b16 %v1700
    %v1738 = vpack.c.b16 %v1723, %v1722
    %v1739 = vpack.c.b16 %v1725, %v1724
    %v1740 = vpack.c.b16 %v1727, %v1726
    %v1741 = vpack.c.b16 %v1729, %v1728
    %v1742 = vpack.c.b16 %v1731, %v1730
    %v1743 = vpack.c.b16 %v1733, %v1732
    %v1744 = vpack.c.b16 %v1735, %v1734
    %v1745 = vpack.c.b16 %v1737, %v1736
    %1754 = vmatprep.subr.bf16.mxu0 0
    %1755 = vmatpush1.bf16.msra.mxu0 %v1745
    %1756 = vmatprep.subr.bf16.mxu0 0
    %1757 = vmatpush1.bf16.msra.mxu0 %v1744
    %1758 = vmatprep.subr.bf16.mxu0 0
    %1759 = vmatpush1.bf16.msra.mxu0 %v1743
    %1760 = vmatprep.subr.bf16.mxu0 0
    %1761 = vmatpush1.bf16.msra.mxu0 %v1742
    %1762 = vmatprep.subr.bf16.mxu0 0
    %1763 = vmatpush1.bf16.msra.mxu0 %v1741
    %1764 = vmatprep.subr.bf16.mxu0 0
    %1765 = vmatpush1.bf16.msra.mxu0 %v1740
    %1766 = vmatprep.subr.bf16.mxu0 0
    %1767 = vmatpush1.bf16.msra.mxu0 %v1739
    %1768 = vmatprep.subr.bf16.mxu0 0
    %1769 = vmatpush1.bf16.msra.mxu0 %v1738
    %1770 = vmatprep.subr.bf16.mxu0 0
    %1771 = vmatpush2.bf16.msra.mxu0 0
    %1772 = vmatprep.subr.bf16.mxu0 0
    %1773 = vmatpush2.bf16.msra.mxu0 0
    %1774 = vmatprep.subr.bf16.mxu0 0
    %1775 = vmatpush2.bf16.msra.mxu0 0
    %1776 = vmatprep.subr.bf16.mxu0 0
    %1777 = vmatpush2.bf16.msra.mxu0 0
    %1778 = vmatprep.subr.bf16.mxu0 0
    %1779 = vmatpush2.bf16.msra.mxu0 0
    %1780 = vmatprep.subr.bf16.mxu0 0
    %1781 = vmatpush2.bf16.msra.mxu0 0
    %1782 = vmatprep.subr.bf16.mxu0 0
    %1783 = vmatpush2.bf16.msra.mxu0 0
    %1784 = vmatprep.subr.bf16.mxu0 0
    %1785 = vmatpush2.bf16.msra.mxu0 0
    %1786 = vmatprep.mubr.bf16.mxu0 0
    %1787 = vmatmul.mubr.bf16.gmra.mxu0 %v1683
    %v1788 = vpop.f32.mrf.mxu0
    %v1789 = vadd.f32 %v1705, %v1788
    %v1790 = vpop.f32.mrf.mxu0
    %v1791 = vpop.f32.mrf.mxu0
    %v1792 = vadd.f32 %v1705, %v1791
    %v1793 = vpop.f32.mrf.mxu0
    %1794 = vdwg.mxu0
    %v1795 = vadd.f32 %v1596, %v1789
    %v1796 = vadd.f32 %v1597, %v1792
    %v1797 = vld [vmem:[%s2 + $0x12] sm:$0x1]
    %v1798 = vld [vmem:[%s2 + $0x13] sm:$0x1]
    %v1799 = vsel %vm38, %v1795, 0.0
    %1800 = vadd.xlane.f32.xlu0 %v1799
    %v1801 = vpop.xlane.xlu0 %1800
    %v1802 = vsel %vm38, %v1796, 0.0
    %1803 = vadd.xlane.f32.xlu0 %v1802
    %v1804 = vpop.xlane.xlu0 %1803
    %v1805 = vmul.f32 %v1801, %v45
    %v1806 = vmul.f32 %v1804, %v45
    %v1807 = vsub.f32 %v1795, %v1805
    %v1808 = vsub.f32 %v1796, %v1806
    %v1809 = vmul.f32 %v1807, %v1807
    %v1810 = vmul.f32 %v1808, %v1808
    %v1811 = vsel %vm38, %v1809, 0.0
    %1812 = vadd.xlane.f32.xlu0 %v1811
    %v1813 = vpop.xlane.xlu0 %1812
    %v1814 = vsel %vm38, %v1810, 0.0
    %1815 = vadd.xlane.f32.xlu0 %v1814
    %v1816 = vpop.xlane.xlu0 %1815
    %v1817 = vmul.f32 %v1813, %v45
    %v1818 = vmul.f32 %v1816, %v45
    %v1819 = vadd.f32 %v1817, 1e-12
    %v1820 = vadd.f32 %v1818, 1e-12
    %v1821 = vrsqrt.pop %v1819
    %v1822 = vrsqrt.pop %v1820
    %v1823 = vmul.f32 %v1807, %v1821
    %v1824 = vmul.f32 %v1808, %v1822
    %v1825 = vlaneseq
    %v1826 = vshrl.u32 %v1825, 7
    %v1827 = vsub.s32 0, %v1826
    %v1828 = vrot.slane %v1797, %v1827
    %v1829 = vmul.f32 %v1823, %v1828
    %v1830 = vmul.f32 %v1824, %v1828
    %v1831 = vlaneseq
    %v1832 = vshrl.u32 %v1831, 7
    %v1833 = vsub.s32 0, %v1832
    %v1834 = vrot.slane %v1798, %v1833
    %v1835 = vadd.f32 %v1829, %v1834
    %v1836 = vadd.f32 %v1830, %v1834
    %v1837 = vpack.c.bf16 %v1835, %v1835
    %v1838 = vpack.c.bf16 %v1836, %v1836
    %v1839 = vld [vmem:[%s7] sm:$0xf]
    %v1840 = vld [vmem:[%s7 + $0x4] sm:$0xf]
    %v1841 = vld [vmem:[%s7 + $0x8] sm:$0xf]
    %v1842 = vld [vmem:[%s7 + $0xc] sm:$0xf]
    %v1843 = vld [vmem:[%s2 + $0x2] sm:$0x1]
    %v1844 = vlaneseq
    %v1845 = vshrl.u32 %v1844, 7
    %v1846 = vsub.s32 0, %v1845
    %v1847 = vrot.slane %v1843, %v1846
    %v1850 = vunpack.c.l.b16 %v1837
    %v1851 = vunpack.c.l.b16 %v1838
    %v1852 = vrot.slane %v1851, 7
    %vm1853 = vcmask 1041409
    %v1854 = vsel %vm1853, %v1852, %v1850
    %v1855 = vpack.c.b16 %v1854, %v1854
    %v1860 = vunpack.c.l.b16 %v1839
    %v1861 = vunpack.c.l.b16 %v1840
    %v1862 = vunpack.c.l.b16 %v1841
    %v1863 = vunpack.c.l.b16 %v1842
    %v1864 = vpack.c.b16 %v1861, %v1860
    %v1865 = vpack.c.b16 %v1863, %v1862
    %v1869 = vsel %vm38, %v1855, 0
    %1871 = vmatprep.subr.bf16.mxu0 0
    %1872 = vmatpush1.bf16.msra.mxu0 0
    %1873 = vmatprep.subr.bf16.mxu0 0
    %1874 = vmatpush1.bf16.msra.mxu0 0
    %1875 = vmatprep.subr.bf16.mxu0 0
    %1876 = vmatpush1.bf16.msra.mxu0 0
    %1877 = vmatprep.subr.bf16.mxu0 0
    %1878 = vmatpush1.bf16.msra.mxu0 0
    %1879 = vmatprep.subr.bf16.mxu0 0
    %1880 = vmatpush1.bf16.msra.mxu0 0
    %1881 = vmatprep.subr.bf16.mxu0 0
    %1882 = vmatpush1.bf16.msra.mxu0 0
    %1883 = vmatprep.subr.bf16.mxu0 0
    %1884 = vmatpush1.bf16.msra.mxu0 %v1865
    %1885 = vmatprep.subr.bf16.mxu0 0
    %1886 = vmatpush1.bf16.msra.mxu0 %v1864
    %1887 = vmatprep.subr.bf16.mxu0 0
    %1888 = vmatpush2.bf16.msra.mxu0 0
    %1889 = vmatprep.subr.bf16.mxu0 0
    %1890 = vmatpush2.bf16.msra.mxu0 0
    %1891 = vmatprep.subr.bf16.mxu0 0
    %1892 = vmatpush2.bf16.msra.mxu0 0
    %1893 = vmatprep.subr.bf16.mxu0 0
    %1894 = vmatpush2.bf16.msra.mxu0 0
    %1895 = vmatprep.subr.bf16.mxu0 0
    %1896 = vmatpush2.bf16.msra.mxu0 0
    %1897 = vmatprep.subr.bf16.mxu0 0
    %1898 = vmatpush2.bf16.msra.mxu0 0
    %1899 = vmatprep.subr.bf16.mxu0 0
    %1900 = vmatpush2.bf16.msra.mxu0 0
    %1901 = vmatprep.subr.bf16.mxu0 0
    %1902 = vmatpush2.bf16.msra.mxu0 0
    %1903 = vmatprep.mubr.bf16.mxu0 0
    %1904 = vmatmul.mubr.bf16.gmra.mxu0 %v1869
    %v1905 = vpop.f32.mrf.mxu0
    %v1906 = vadd.f32 %v1847, %v1905
    %v1907 = vpop.f32.mrf.mxu0
    %v1908 = vpop.f32.mrf.mxu0
    %v1909 = vpop.f32.mrf.mxu0
    %1910 = vdwg.mxu0
    %v1911 = vtanh.pop %v1906
    %v1912 = vld [vmem:[%s2 + $0x14] sm:$0x3]
    %v1913 = vmul.f32 %v1911, %v1912
    %v1914 = vpack.c.bf16 %v1913, %v1913
    %v1915 = vld [vmem:[%s8] sm:$0xf]
    %v1916 = vld [vmem:[%s8 + $0x4] sm:$0xf]
    %v1917 = vld [vmem:[%s8 + $0x8] sm:$0xf]
    %v1918 = vld [vmem:[%s8 + $0xc] sm:$0xf]
    %v1919 = vld [vmem:[%s2 + $0x3] sm:$0x1]
    %v1920 = vlaneseq
    %v1921 = vshrl.u32 %v1920, 7
    %v1922 = vsub.s32 0, %v1921
    %v1923 = vrot.slane %v1919, %v1922
    %v1928 = vunpack.c.l.b16 %v1915
    %v1929 = vunpack.c.l.b16 %v1916
    %v1930 = vunpack.c.l.b16 %v1917
    %v1931 = vunpack.c.l.b16 %v1918
    %v1932 = vpack.c.b16 %v1929, %v1928
    %v1933 = vpack.c.b16 %v1931, %v1930
    %v1937 = vsel %vm38, %v1914, 0
    %1939 = vmatprep.subr.bf16.mxu0 0
    %1940 = vmatpush1.bf16.msra.mxu0 0
    %1941 = vmatprep.subr.bf16.mxu0 0
    %1942 = vmatpush1.bf16.msra.mxu0 0
    %1943 = vmatprep.subr.bf16.mxu0 0
    %1944 = vmatpush1.bf16.msra.mxu0 0
    %1945 = vmatprep.subr.bf16.mxu0 0
    %1946 = vmatpush1.bf16.msra.mxu0 0
    %1947 = vmatprep.subr.bf16.mxu0 0
    %1948 = vmatpush1.bf16.msra.mxu0 0
    %1949 = vmatprep.subr.bf16.mxu0 0
    %1950 = vmatpush1.bf16.msra.mxu0 0
    %1951 = vmatprep.subr.bf16.mxu0 0
    %1952 = vmatpush1.bf16.msra.mxu0 %v1933
    %1953 = vmatprep.subr.bf16.mxu0 0
    %1954 = vmatpush1.bf16.msra.mxu0 %v1932
    %1955 = vmatprep.subr.bf16.mxu0 0
    %1956 = vmatpush2.bf16.msra.mxu0 0
    %1957 = vmatprep.subr.bf16.mxu0 0
    %1958 = vmatpush2.bf16.msra.mxu0 0
    %1959 = vmatprep.subr.bf16.mxu0 0
    %1960 = vmatpush2.bf16.msra.mxu0 0
    %1961 = vmatprep.subr.bf16.mxu0 0
    %1962 = vmatpush2.bf16.msra.mxu0 0
    %1963 = vmatprep.subr.bf16.mxu0 0
    %1964 = vmatpush2.bf16.msra.mxu0 0
    %1965 = vmatprep.subr.bf16.mxu0 0
    %1966 = vmatpush2.bf16.msra.mxu0 0
    %1967 = vmatprep.subr.bf16.mxu0 0
    %1968 = vmatpush2.bf16.msra.mxu0 0
    %1969 = vmatprep.subr.bf16.mxu0 0
    %1970 = vmatpush2.bf16.msra.mxu0 0
    %1971 = vmatprep.mubr.bf16.mxu0 0
    %1972 = vmatmul.mubr.bf16.gmra.mxu0 %v1937
    %v1973 = vpop.f32.mrf.mxu0
    %v1974 = vadd.f32 %v1923, %v1973
    %v1975 = vpop.f32.mrf.mxu0
    %v1976 = vpop.f32.mrf.mxu0
    %v1977 = vpop.f32.mrf.mxu0
    %1978 = vdwg.mxu0
    %1979 = vst [vmem:[#allocation2] sm:$0x3] %v1974
    // Predicated region
    $region38: #{sentiment_classifier_forward.1} parent=1 // pred_check
      _
    $region39: #{sentiment_classifier_forward.1} parent=1 // pred_check_branch
      %1981 = sbr.rel (0) target = $region41
    $region40: #{sentiment_classifier_forward.1} parent=1 // pred_region
      %s1983 = ssub.s32 32, 32
      %1984 = vsyncadd [#allocation3], %s1983
      %s1986 = sshll.u32 [#allocation2], 4
      %s1987 = int_to_ptr.vmem [resolvable:$true] %s1986
      %1989 = dma.vmem_to_hbm [thread:$0]  %s1987, 32, %s9, [#allocation3]
    $region41: #{sentiment_classifier_forward.1} parent=1 // pred_fallthru
      _
    // Predicated region
    $region42: #{sentiment_classifier_forward.1} parent=1 // pred_check
      _
    $region43: #{sentiment_classifier_forward.1} parent=1 // pred_check_branch
      %1991 = sbr.rel (0) target = $region45
    $region44: #{sentiment_classifier_forward.1} parent=1 // pred_region
      %1992 = dma.done [#allocation3], 32
    $region45: #{sentiment_classifier_forward.1} parent=1 // pred_fallthru
      _
    %1993 = vsyncpa [#allocation3], 1

</llo_original>
